<compile_context>
chip_gen: v7x
topology: tpu7x:2x2x1
jax: 0.10.0
libtpu: 0.0.40
codegen_flags: <defaults>
</compile_context>

<pallas_src>
import math
import functools

import jax
import jax.numpy as jnp
from jax.experimental import pallas as pl
from jax.experimental.pallas import tpu as pltpu

LN_EPS = 1e-5


def _layernorm(x, w, b):
    mu = jnp.mean(x, axis=-1, keepdims=True)
    xc = x - mu
    var = jnp.mean(xc * xc, axis=-1, keepdims=True)
    return xc * jax.lax.rsqrt(var + LN_EPS) * w + b


def _gelu_tanh(x):
    # tanh-approximate GELU: transcendental goes to the EUP slot.
    c = math.sqrt(2.0 / math.pi)
    return 0.5 * x * (1.0 + jnp.tanh(c * (x + 0.044715 * x * x * x)))


def block_kernel(x_ref, ln1w_ref, ln1b_ref, wqkv_ref, wproj_ref, bproj_ref,
                 ln2w_ref, ln2b_ref, wfc1_ref, bfc1_ref, wfc2_ref, bfc2_ref,
                 out_ref, *, num_heads):
    f32, bf16 = jnp.float32, jnp.bfloat16
    x = x_ref[0].astype(f32)                           # (N, C), residual kept f32
    n_tok, dim = x.shape
    hd = dim // num_heads

    # ---------- attention branch: x + proj(softmax(q k^T * scale) v) ----------
    xn = _layernorm(x, ln1w_ref[...], ln1b_ref[...])   # f32

    # Single fused, lane-dense QKV projection at full MXU width:
    # (N, C) @ (C, 3C) -> (N, 3C).  Attention scale is pre-folded into the
    # Q columns of wqkv host-side.
    qkv = jnp.dot(xn.astype(bf16), wqkv_ref[...], preferred_element_type=f32)

    def heads(t):                                      # (N, C) -> (H, N, hd) bf16
        return jnp.transpose(t.astype(bf16).reshape(n_tok, num_heads, hd),
                             (1, 0, 2))

    q = heads(qkv[:, 0 * dim:1 * dim])
    k = heads(qkv[:, 1 * dim:2 * dim])
    v = heads(qkv[:, 2 * dim:3 * dim])

    s = jnp.einsum('hnd,hmd->hnm', q, k,
                   preferred_element_type=f32)         # (H, N, N) f32
    s = s - jnp.max(s, axis=-1, keepdims=True)
    p = jnp.exp(s)
    p = p * pl.reciprocal(jnp.sum(p, axis=-1, keepdims=True), approx=True)

    o = jnp.einsum('hnm,hmd->hnd', p.astype(bf16), v,
                   preferred_element_type=f32)         # (H, N, hd)
    o = jnp.transpose(o, (1, 0, 2)).reshape(n_tok, dim)        # (N, C)

    # Lane-dense output projection: (N, C) @ (C, C); the head/dim reduction
    # accumulates inside the MXU (no (H, N, C) partials slab, no VALU sum).
    attn = jnp.dot(o.astype(bf16), wproj_ref[...], preferred_element_type=f32)
    x = x + attn + bproj_ref[...]

    # ---------- MLP branch: x + fc2(gelu(fc1(norm2(x)))) ----------
    xn2 = _layernorm(x, ln2w_ref[...], ln2b_ref[...])
    h1 = jnp.dot(xn2.astype(bf16), wfc1_ref[...],
                 preferred_element_type=f32)                     # (N, hidden) f32
    h1 = _gelu_tanh((h1 + bfc1_ref[...]).astype(bf16))           # bf16 VPU/EUP path
    h2 = jnp.dot(h1, wfc2_ref[...],
                 preferred_element_type=f32) + bfc2_ref[...]     # (N, C) f32

    out_ref[0] = (x + h2).astype(out_ref.dtype)


WEIGHT_ORDER = ("ln1w", "ln1b", "wqkv", "wproj", "bproj",
                "ln2w", "ln2b", "wfc1", "bfc1", "wfc2", "bfc2")


def _prepare_weights(params, num_heads):
    """Host-side weight re-layout: PyTorch (out,in) -> kernel-friendly layouts."""
    f32, bf16 = jnp.float32, jnp.bfloat16
    dim = params["wproj"].shape[0]
    hd = dim // num_heads
    scale = hd ** -0.5

    # Fused QKV: torch (3C, C) -> (C, 3C) so x @ wqkv == torch qkv(x).
    # Fold the attention scale into the Q output columns (first C columns).
    wqkv = params["wqkv"].astype(f32).T                            # (C, 3C)
    col_scale = jnp.concatenate([jnp.full((dim,), scale, f32),
                                 jnp.ones((2 * dim,), f32)])
    wqkv = wqkv * col_scale[None, :]

    return {
        "ln1w": params["ln1w"].astype(f32), "ln1b": params["ln1b"].astype(f32),
        "wqkv": wqkv.astype(bf16),                                 # (C, 3C)
        "wproj": params["wproj"].astype(f32).T.astype(bf16),       # (C, C)
        "bproj": params["bproj"].astype(f32),
        "ln2w": params["ln2w"].astype(f32), "ln2b": params["ln2b"].astype(f32),
        "wfc1": params["wfc1"].astype(f32).T.astype(bf16),         # (C, hidden)
        "bfc1": params["bfc1"].astype(f32),
        "wfc2": params["wfc2"].astype(f32).T.astype(bf16),         # (hidden, C)
        "bfc2": params["bfc2"].astype(f32),
    }


def vit_block(x, params, num_heads):
    B, N, C = x.shape
    hidden = params["wfc1"].shape[0]
    hd = C // num_heads

    w = _prepare_weights(params, num_heads)
    weights = [w[name] for name in WEIGHT_ORDER]

    # Grid-invariant weights live untiled (single-buffered) in VMEM; only the
    # (1, N, C) activation blocks are pipelined over the batch grid.
    weight_spec = pl.BlockSpec(memory_space=pltpu.MemorySpace.VMEM)
    in_specs = [pl.BlockSpec((1, N, C), lambda b: (b, 0, 0))]
    in_specs += [weight_spec] * len(weights)

    # Itemized VMEM budget matching the kernel structure.
    weight_bytes = sum(a.size * a.dtype.itemsize for a in weights)
    io_bytes = 2 * 2 * N * C * 4                      # double-buffered x / out blocks
    n_pad = ((N + 7) // 8) * 8
    hd_pad = max(hd, 128)                             # per-head lane padding
    inter_bytes = 4 * (N * 3 * C                      # fused qkv output (f32)
                       + 2 * num_heads * N * N        # scores / probs (f32)
                       + num_heads * N * hd           # A @ V result (f32)
                       + N * hidden                   # MLP hidden (f32)
                       + 4 * N * C)                   # residual / LN / misc f32 temps
    inter_bytes += 2 * (4 * num_heads * n_pad * hd_pad  # q/k/v/o bf16 head slabs (padded)
                        + num_heads * N * N             # probs bf16
                        + N * 3 * C + N * hidden)       # bf16 casts of qkv / h1

    try:
        vmem_cap = pltpu.get_tpu_info().vmem_capacity_bytes
    except Exception:
        vmem_cap = 64 * 1024 * 1024
    vmem_limit = int(min(int(0.80 * vmem_cap),
                         max(4 * 1024 * 1024,
                             int(1.25 * (weight_bytes + io_bytes + inter_bytes)))))

    kernel = functools.partial(block_kernel, num_heads=num_heads)
    return pl.pallas_call(
        kernel,
        out_shape=jax.ShapeDtypeStruct((B, N, C), x.dtype),
        grid=(B,),
        in_specs=in_specs,
        out_specs=pl.BlockSpec((1, N, C), lambda b: (b, 0, 0)),
        compiler_params=pltpu.CompilerParams(
            dimension_semantics=("parallel",),
            vmem_limit_bytes=vmem_limit),
    )(x, *weights)


def init_params(key, dim, num_heads, mlp_ratio=4.0):
    hidden = int(dim * mlp_ratio)
    ks = jax.random.split(key, 8)
    std = 0.02
    return {
        # LayerNorm affine params kept 2-D (1, C) for clean lane broadcasting.
        "ln1w": jnp.ones((1, dim), jnp.float32),
        "ln1b": jnp.zeros((1, dim), jnp.float32),
        "ln2w": jnp.ones((1, dim), jnp.float32),
        "ln2b": jnp.zeros((1, dim), jnp.float32),
        # Attention: qkv (no bias; qkv_bias=False default), proj (with bias).
        # Stored PyTorch-style (out_features, in_features).
        "wqkv": std * jax.random.normal(ks[0], (3 * dim, dim), jnp.float32),
        "wproj": std * jax.random.normal(ks[1], (dim, dim), jnp.float32),
        "bproj": std * jax.random.normal(ks[2], (1, dim), jnp.float32),
        # MLP: fc1 / fc2 with bias.
        "wfc1": std * jax.random.normal(ks[3], (hidden, dim), jnp.float32),
        "bfc1": std * jax.random.normal(ks[4], (1, hidden), jnp.float32),
        "wfc2": std * jax.random.normal(ks[5], (dim, hidden), jnp.float32),
        "bfc2": std * jax.random.normal(ks[6], (1, dim), jnp.float32),
    }


if __name__ == "__main__":
    B, N, C = 2, 8, 32
    NUM_HEADS = 4

    key = jax.random.PRNGKey(0)
    kx, kp = jax.random.split(key)
    x = jax.random.normal(kx, (B, N, C), jnp.float32)
    params = init_params(kp, C, NUM_HEADS, mlp_ratio=4.0)

    out = vit_block(x, params, NUM_HEADS)
    out = jax.block_until_ready(out)
    assert out.shape == (B, N, C) and out.dtype == jnp.float32
    print("KERNEL_OK")
</pallas_src>

<mosaic_0001>
module attributes {stable_mosaic.version = 11 : i64} {
  func.func @block_kernel(%arg0: i32, %arg1: memref<1x8x32xf32, #tpu.memory_space<vmem>>, %arg2: memref<1x32xf32, #tpu.memory_space<vmem>>, %arg3: memref<1x32xf32, #tpu.memory_space<vmem>>, %arg4: memref<32x96xbf16, #tpu.memory_space<vmem>>, %arg5: memref<32x32xbf16, #tpu.memory_space<vmem>>, %arg6: memref<1x32xf32, #tpu.memory_space<vmem>>, %arg7: memref<1x32xf32, #tpu.memory_space<vmem>>, %arg8: memref<1x32xf32, #tpu.memory_space<vmem>>, %arg9: memref<32x128xbf16, #tpu.memory_space<vmem>>, %arg10: memref<1x128xf32, #tpu.memory_space<vmem>>, %arg11: memref<128x32xbf16, #tpu.memory_space<vmem>>, %arg12: memref<1x32xf32, #tpu.memory_space<vmem>>, %arg13: memref<1x8x32xf32, #tpu.memory_space<vmem>>) attributes {dimension_semantics = [#tpu.dimension_semantics<parallel>], iteration_bounds = array<i64: 2>, scalar_prefetch = 0 : i64, scratch_operands = 0 : i64, tpu.core_type = #tpu.core_type<tc>, window_params = [{transform_indices = @transform_0, window_bounds = array<i64: 1, 8, 32>}, {pipeline_mode = #tpu.pipeline_mode<synchronous>, transform_indices = @transform_1, window_bounds = array<i64: 1, 32>}, {pipeline_mode = #tpu.pipeline_mode<synchronous>, transform_indices = @transform_2, window_bounds = array<i64: 1, 32>}, {pipeline_mode = #tpu.pipeline_mode<synchronous>, transform_indices = @transform_3, window_bounds = array<i64: 32, 96>}, {pipeline_mode = #tpu.pipeline_mode<synchronous>, transform_indices = @transform_4, window_bounds = array<i64: 32, 32>}, {pipeline_mode = #tpu.pipeline_mode<synchronous>, transform_indices = @transform_5, window_bounds = array<i64: 1, 32>}, {pipeline_mode = #tpu.pipeline_mode<synchronous>, transform_indices = @transform_6, window_bounds = array<i64: 1, 32>}, {pipeline_mode = #tpu.pipeline_mode<synchronous>, transform_indices = @transform_7, window_bounds = array<i64: 1, 32>}, {pipeline_mode = #tpu.pipeline_mode<synchronous>, transform_indices = @transform_8, window_bounds = array<i64: 32, 128>}, {pipeline_mode = #tpu.pipeline_mode<synchronous>, transform_indices = @transform_9, window_bounds = array<i64: 1, 128>}, {pipeline_mode = #tpu.pipeline_mode<synchronous>, transform_indices = @transform_10, window_bounds = array<i64: 128, 32>}, {pipeline_mode = #tpu.pipeline_mode<synchronous>, transform_indices = @transform_11, window_bounds = array<i64: 1, 32>}, {transform_indices = @transform_12, window_bounds = array<i64: 1, 8, 32>}]} {
    %c0 = arith.constant 0 : index
    %c0_0 = arith.constant 0 : index
    %c0_1 = arith.constant 0 : index
    %0 = vector.load %arg1[%c0, %c0_0, %c0_1] : memref<1x8x32xf32, #tpu.memory_space<vmem>>, vector<1x8x32xf32>
    %1 = vector.shape_cast %0 : vector<1x8x32xf32> to vector<8x32xf32>
    %c0_2 = arith.constant 0 : index
    %c0_3 = arith.constant 0 : index
    %2 = vector.load %arg2[%c0_2, %c0_3] : memref<1x32xf32, #tpu.memory_space<vmem>>, vector<1x32xf32>
    %c0_4 = arith.constant 0 : index
    %c0_5 = arith.constant 0 : index
    %3 = vector.load %arg3[%c0_4, %c0_5] : memref<1x32xf32, #tpu.memory_space<vmem>>, vector<1x32xf32>
    %cst = arith.constant dense<0.000000e+00> : vector<8xf32>
    %4 = vector.multi_reduction <add>, %1, %cst [1] : vector<8x32xf32> to vector<8xf32>
    %5 = vector.shape_cast %4 : vector<8xf32> to vector<8x1xf32>
    %cst_6 = arith.constant 3.200000e+01 : f32
    %6 = vector.broadcast %cst_6 : f32 to vector<8x1xf32>
    %7 = arith.divf %5, %6 : vector<8x1xf32>
    %8 = vector.broadcast %7 : vector<8x1xf32> to vector<8x32xf32>
    %9 = arith.subf %1, %8 : vector<8x32xf32>
    %10 = arith.mulf %9, %9 : vector<8x32xf32>
    %cst_7 = arith.constant dense<0.000000e+00> : vector<8xf32>
    %11 = vector.multi_reduction <add>, %10, %cst_7 [1] : vector<8x32xf32> to vector<8xf32>
    %12 = vector.shape_cast %11 : vector<8xf32> to vector<8x1xf32>
    %cst_8 = arith.constant 3.200000e+01 : f32
    %13 = vector.broadcast %cst_8 : f32 to vector<8x1xf32>
    %14 = arith.divf %12, %13 : vector<8x1xf32>
    %cst_9 = arith.constant 9.99999974E-6 : f32
    %15 = vector.broadcast %cst_9 : f32 to vector<8x1xf32>
    %16 = arith.addf %14, %15 : vector<8x1xf32>
    %17 = math.rsqrt %16 : vector<8x1xf32>
    %18 = vector.broadcast %17 : vector<8x1xf32> to vector<8x32xf32>
    %19 = arith.mulf %9, %18 : vector<8x32xf32>
    %20 = vector.broadcast %2 : vector<1x32xf32> to vector<8x32xf32>
    %21 = arith.mulf %19, %20 : vector<8x32xf32>
    %22 = vector.broadcast %3 : vector<1x32xf32> to vector<8x32xf32>
    %23 = arith.addf %21, %22 : vector<8x32xf32>
    %24 = arith.truncf %23 : vector<8x32xf32> to vector<8x32xbf16>
    %c0_10 = arith.constant 0 : index
    %c0_11 = arith.constant 0 : index
    %25 = vector.load %arg4[%c0_10, %c0_11] : memref<32x96xbf16, #tpu.memory_space<vmem>>, vector<32x96xbf16>
    %cst_12 = arith.constant dense<0.000000e+00> : vector<8x96xf32>
    %26 = tpu.matmul %24, %25, %cst_12 {dimension_numbers = #tpu.dot_dimension_numbers<[1], [0], [0], [1], [0, 0, 1, 1], [], []>} : vector<8x32xbf16>, vector<32x96xbf16>, vector<8x96xf32> -> vector<8x96xf32>
    %27 = vector.extract_strided_slice %26 {offsets = [0, 0], sizes = [8, 32], strides = [1, 1]} : vector<8x96xf32> to vector<8x32xf32>
    %28 = arith.truncf %27 : vector<8x32xf32> to vector<8x32xbf16>
    %29 = vector.shape_cast %28 : vector<8x32xbf16> to vector<8x4x8xbf16>
    %30 = tpu.transpose %29, [1, 0, 2] : vector<8x4x8xbf16> -> vector<4x8x8xbf16>
    %31 = vector.extract_strided_slice %26 {offsets = [0, 32], sizes = [8, 32], strides = [1, 1]} : vector<8x96xf32> to vector<8x32xf32>
    %32 = arith.truncf %31 : vector<8x32xf32> to vector<8x32xbf16>
    %33 = vector.shape_cast %32 : vector<8x32xbf16> to vector<8x4x8xbf16>
    %34 = tpu.transpose %33, [1, 0, 2] : vector<8x4x8xbf16> -> vector<4x8x8xbf16>
    %35 = vector.extract_strided_slice %26 {offsets = [0, 64], sizes = [8, 32], strides = [1, 1]} : vector<8x96xf32> to vector<8x32xf32>
    %36 = arith.truncf %35 : vector<8x32xf32> to vector<8x32xbf16>
    %37 = vector.shape_cast %36 : vector<8x32xbf16> to vector<8x4x8xbf16>
    %38 = tpu.transpose %37, [1, 0, 2] : vector<8x4x8xbf16> -> vector<4x8x8xbf16>
    "tpu.trace_start"() <{level = 10 : i32, message = "hnd,hmd->hnm"}> : () -> ()
    %cst_13 = arith.constant dense<0.000000e+00> : vector<4x8x8xf32>
    %39 = tpu.matmul %30, %34, %cst_13 {dimension_numbers = #tpu.dot_dimension_numbers<[2], [2], [1], [1], [0, 0, 0, 1, 1, 1], [0], [0]>} : vector<4x8x8xbf16>, vector<4x8x8xbf16>, vector<4x8x8xf32> -> vector<4x8x8xf32>
    "tpu.trace_stop"() : () -> ()
    %cst_14 = arith.constant dense<0xFF800000> : vector<4x8xf32>
    %40 = vector.multi_reduction <maximumf>, %39, %cst_14 [2] : vector<4x8x8xf32> to vector<4x8xf32>
    %41 = vector.shape_cast %40 : vector<4x8xf32> to vector<4x8x1xf32>
    %42 = vector.broadcast %41 : vector<4x8x1xf32> to vector<4x8x8xf32>
    %43 = arith.subf %39, %42 : vector<4x8x8xf32>
    %44 = math.exp %43 : vector<4x8x8xf32>
    %cst_15 = arith.constant dense<0.000000e+00> : vector<4x8xf32>
    %45 = vector.multi_reduction <add>, %44, %cst_15 [2] : vector<4x8x8xf32> to vector<4x8xf32>
    %46 = vector.shape_cast %45 : vector<4x8xf32> to vector<4x8x1xf32>
    %47 = tpu.reciprocal %46 {approx = true} : vector<4x8x1xf32> -> vector<4x8x1xf32>
    %48 = vector.broadcast %47 : vector<4x8x1xf32> to vector<4x8x8xf32>
    %49 = arith.mulf %44, %48 : vector<4x8x8xf32>
    %50 = arith.truncf %49 : vector<4x8x8xf32> to vector<4x8x8xbf16>
    "tpu.trace_start"() <{level = 10 : i32, message = "hnm,hmd->hnd"}> : () -> ()
    %cst_16 = arith.constant dense<0.000000e+00> : vector<4x8x8xf32>
    %51 = tpu.matmul %50, %38, %cst_16 {dimension_numbers = #tpu.dot_dimension_numbers<[2], [1], [1], [2], [0, 0, 0, 1, 1, 2], [0], [0]>} : vector<4x8x8xbf16>, vector<4x8x8xbf16>, vector<4x8x8xf32> -> vector<4x8x8xf32>
    "tpu.trace_stop"() : () -> ()
    %52 = tpu.transpose %51, [1, 0, 2] : vector<4x8x8xf32> -> vector<8x4x8xf32>
    %53 = vector.shape_cast %52 : vector<8x4x8xf32> to vector<8x32xf32>
    %54 = arith.truncf %53 : vector<8x32xf32> to vector<8x32xbf16>
    %c0_17 = arith.constant 0 : index
    %c0_18 = arith.constant 0 : index
    %55 = vector.load %arg5[%c0_17, %c0_18] : memref<32x32xbf16, #tpu.memory_space<vmem>>, vector<32x32xbf16>
    %cst_19 = arith.constant dense<0.000000e+00> : vector<8x32xf32>
    %56 = tpu.matmul %54, %55, %cst_19 {dimension_numbers = #tpu.dot_dimension_numbers<[1], [0], [0], [1], [0, 0, 1, 1], [], []>} : vector<8x32xbf16>, vector<32x32xbf16>, vector<8x32xf32> -> vector<8x32xf32>
    %57 = arith.addf %1, %56 : vector<8x32xf32>
    %c0_20 = arith.constant 0 : index
    %c0_21 = arith.constant 0 : index
    %58 = vector.load %arg6[%c0_20, %c0_21] : memref<1x32xf32, #tpu.memory_space<vmem>>, vector<1x32xf32>
    %59 = vector.broadcast %58 : vector<1x32xf32> to vector<8x32xf32>
    %60 = arith.addf %57, %59 : vector<8x32xf32>
    %c0_22 = arith.constant 0 : index
    %c0_23 = arith.constant 0 : index
    %61 = vector.load %arg7[%c0_22, %c0_23] : memref<1x32xf32, #tpu.memory_space<vmem>>, vector<1x32xf32>
    %c0_24 = arith.constant 0 : index
    %c0_25 = arith.constant 0 : index
    %62 = vector.load %arg8[%c0_24, %c0_25] : memref<1x32xf32, #tpu.memory_space<vmem>>, vector<1x32xf32>
    %cst_26 = arith.constant dense<0.000000e+00> : vector<8xf32>
    %63 = vector.multi_reduction <add>, %60, %cst_26 [1] : vector<8x32xf32> to vector<8xf32>
    %64 = vector.shape_cast %63 : vector<8xf32> to vector<8x1xf32>
    %cst_27 = arith.constant 3.200000e+01 : f32
    %65 = vector.broadcast %cst_27 : f32 to vector<8x1xf32>
    %66 = arith.divf %64, %65 : vector<8x1xf32>
    %67 = vector.broadcast %66 : vector<8x1xf32> to vector<8x32xf32>
    %68 = arith.subf %60, %67 : vector<8x32xf32>
    %69 = arith.mulf %68, %68 : vector<8x32xf32>
    %cst_28 = arith.constant dense<0.000000e+00> : vector<8xf32>
    %70 = vector.multi_reduction <add>, %69, %cst_28 [1] : vector<8x32xf32> to vector<8xf32>
    %71 = vector.shape_cast %70 : vector<8xf32> to vector<8x1xf32>
    %cst_29 = arith.constant 3.200000e+01 : f32
    %72 = vector.broadcast %cst_29 : f32 to vector<8x1xf32>
    %73 = arith.divf %71, %72 : vector<8x1xf32>
    %cst_30 = arith.constant 9.99999974E-6 : f32
    %74 = vector.broadcast %cst_30 : f32 to vector<8x1xf32>
    %75 = arith.addf %73, %74 : vector<8x1xf32>
    %76 = math.rsqrt %75 : vector<8x1xf32>
    %77 = vector.broadcast %76 : vector<8x1xf32> to vector<8x32xf32>
    %78 = arith.mulf %68, %77 : vector<8x32xf32>
    %79 = vector.broadcast %61 : vector<1x32xf32> to vector<8x32xf32>
    %80 = arith.mulf %78, %79 : vector<8x32xf32>
    %81 = vector.broadcast %62 : vector<1x32xf32> to vector<8x32xf32>
    %82 = arith.addf %80, %81 : vector<8x32xf32>
    %83 = arith.truncf %82 : vector<8x32xf32> to vector<8x32xbf16>
    %c0_31 = arith.constant 0 : index
    %c0_32 = arith.constant 0 : index
    %84 = vector.load %arg9[%c0_31, %c0_32] : memref<32x128xbf16, #tpu.memory_space<vmem>>, vector<32x128xbf16>
    %cst_33 = arith.constant dense<0.000000e+00> : vector<8x128xf32>
    %85 = tpu.matmul %83, %84, %cst_33 {dimension_numbers = #tpu.dot_dimension_numbers<[1], [0], [0], [1], [0, 0, 1, 1], [], []>} : vector<8x32xbf16>, vector<32x128xbf16>, vector<8x128xf32> -> vector<8x128xf32>
    %c0_34 = arith.constant 0 : index
    %c0_35 = arith.constant 0 : index
    %86 = vector.load %arg10[%c0_34, %c0_35] : memref<1x128xf32, #tpu.memory_space<vmem>>, vector<1x128xf32>
    %87 = vector.broadcast %86 : vector<1x128xf32> to vector<8x128xf32>
    %88 = arith.addf %85, %87 : vector<8x128xf32>
    %89 = arith.truncf %88 : vector<8x128xf32> to vector<8x128xbf16>
    %cst_36 = arith.constant 5.000000e-01 : bf16
    %90 = vector.broadcast %cst_36 : bf16 to vector<8x128xbf16>
    %91 = arith.mulf %90, %89 : vector<8x128xbf16>
    %cst_37 = arith.constant 4.467770e-02 : bf16
    %92 = vector.broadcast %cst_37 : bf16 to vector<8x128xbf16>
    %93 = arith.mulf %92, %89 : vector<8x128xbf16>
    %94 = arith.mulf %93, %89 : vector<8x128xbf16>
    %95 = arith.mulf %94, %89 : vector<8x128xbf16>
    %96 = arith.addf %89, %95 : vector<8x128xbf16>
    %cst_38 = arith.constant 7.968750e-01 : bf16
    %97 = vector.broadcast %cst_38 : bf16 to vector<8x128xbf16>
    %98 = arith.mulf %97, %96 : vector<8x128xbf16>
    %99 = math.tanh %98 : vector<8x128xbf16>
    %cst_39 = arith.constant 1.000000e+00 : bf16
    %100 = vector.broadcast %cst_39 : bf16 to vector<8x128xbf16>
    %101 = arith.addf %100, %99 : vector<8x128xbf16>
    %102 = arith.mulf %91, %101 : vector<8x128xbf16>
    %c0_40 = arith.constant 0 : index
    %c0_41 = arith.constant 0 : index
    %103 = vector.load %arg11[%c0_40, %c0_41] : memref<128x32xbf16, #tpu.memory_space<vmem>>, vector<128x32xbf16>
    %cst_42 = arith.constant dense<0.000000e+00> : vector<8x32xf32>
    %104 = tpu.matmul %102, %103, %cst_42 {dimension_numbers = #tpu.dot_dimension_numbers<[1], [0], [0], [1], [0, 0, 1, 1], [], []>} : vector<8x128xbf16>, vector<128x32xbf16>, vector<8x32xf32> -> vector<8x32xf32>
    %c0_43 = arith.constant 0 : index
    %c0_44 = arith.constant 0 : index
    %105 = vector.load %arg12[%c0_43, %c0_44] : memref<1x32xf32, #tpu.memory_space<vmem>>, vector<1x32xf32>
    %106 = vector.broadcast %105 : vector<1x32xf32> to vector<8x32xf32>
    %107 = arith.addf %104, %106 : vector<8x32xf32>
    %108 = arith.addf %60, %107 : vector<8x32xf32>
    %c0_45 = arith.constant 0 : index
    %c0_46 = arith.constant 0 : index
    %c0_47 = arith.constant 0 : index
    %109 = vector.load %arg13[%c0_45, %c0_46, %c0_47] : memref<1x8x32xf32, #tpu.memory_space<vmem>>, vector<1x8x32xf32>
    %110 = vector.shape_cast %109 : vector<1x8x32xf32> to vector<8x32xf32>
    %111 = vector.shape_cast %108 : vector<8x32xf32> to vector<1x8x32xf32>
    tpu.vector_store %arg13[%c0_45, %c0_46, %c0_47], %111 {strides = array<i32>} : memref<1x8x32xf32, #tpu.memory_space<vmem>>, vector<1x8x32xf32>,
    return
  }
  func.func @transform_0(%arg0: i32) -> (i32, i32, i32) {
    %c0_i32 = arith.constant 0 : i32
    %c0_i32_0 = arith.constant 0 : i32
    %c0_i32_1 = arith.constant 0 : i32
    return %arg0, %c0_i32, %c0_i32_0 : i32, i32, i32
  }
  func.func @transform_1(%arg0: i32) -> (i32, i32) {
    %c0_i32 = arith.constant 0 : i32
    %c0_i32_0 = arith.constant 0 : i32
    %c0_i32_1 = arith.constant 0 : i32
    return %c0_i32, %c0_i32_0 : i32, i32
  }
  func.func @transform_2(%arg0: i32) -> (i32, i32) {
    %c0_i32 = arith.constant 0 : i32
    %c0_i32_0 = arith.constant 0 : i32
    %c0_i32_1 = arith.constant 0 : i32
    return %c0_i32, %c0_i32_0 : i32, i32
  }
  func.func @transform_3(%arg0: i32) -> (i32, i32) {
    %c0_i32 = arith.constant 0 : i32
    %c0_i32_0 = arith.constant 0 : i32
    %c0_i32_1 = arith.constant 0 : i32
    return %c0_i32, %c0_i32_0 : i32, i32
  }
  func.func @transform_4(%arg0: i32) -> (i32, i32) {
    %c0_i32 = arith.constant 0 : i32
    %c0_i32_0 = arith.constant 0 : i32
    %c0_i32_1 = arith.constant 0 : i32
    return %c0_i32, %c0_i32_0 : i32, i32
  }
  func.func @transform_5(%arg0: i32) -> (i32, i32) {
    %c0_i32 = arith.constant 0 : i32
    %c0_i32_0 = arith.constant 0 : i32
    %c0_i32_1 = arith.constant 0 : i32
    return %c0_i32, %c0_i32_0 : i32, i32
  }
  func.func @transform_6(%arg0: i32) -> (i32, i32) {
    %c0_i32 = arith.constant 0 : i32
    %c0_i32_0 = arith.constant 0 : i32
    %c0_i32_1 = arith.constant 0 : i32
    return %c0_i32, %c0_i32_0 : i32, i32
  }
  func.func @transform_7(%arg0: i32) -> (i32, i32) {
    %c0_i32 = arith.constant 0 : i32
    %c0_i32_0 = arith.constant 0 : i32
    %c0_i32_1 = arith.constant 0 : i32
    return %c0_i32, %c0_i32_0 : i32, i32
  }
  func.func @transform_8(%arg0: i32) -> (i32, i32) {
    %c0_i32 = arith.constant 0 : i32
    %c0_i32_0 = arith.constant 0 : i32
    %c0_i32_1 = arith.constant 0 : i32
    return %c0_i32, %c0_i32_0 : i32, i32
  }
  func.func @transform_9(%arg0: i32) -> (i32, i32) {
    %c0_i32 = arith.constant 0 : i32
    %c0_i32_0 = arith.constant 0 : i32
    %c0_i32_1 = arith.constant 0 : i32
    return %c0_i32, %c0_i32_0 : i32, i32
  }
  func.func @transform_10(%arg0: i32) -> (i32, i32) {
    %c0_i32 = arith.constant 0 : i32
    %c0_i32_0 = arith.constant 0 : i32
    %c0_i32_1 = arith.constant 0 : i32
    return %c0_i32, %c0_i32_0 : i32, i32
  }
  func.func @transform_11(%arg0: i32) -> (i32, i32) {
    %c0_i32 = arith.constant 0 : i32
    %c0_i32_0 = arith.constant 0 : i32
    %c0_i32_1 = arith.constant 0 : i32
    return %c0_i32, %c0_i32_0 : i32, i32
  }
  func.func @transform_12(%arg0: i32) -> (i32, i32, i32) {
    %c0_i32 = arith.constant 0 : i32
    %c0_i32_0 = arith.constant 0 : i32
    %c0_i32_1 = arith.constant 0 : i32
    return %arg0, %c0_i32, %c0_i32_0 : i32, i32, i32
  }
}

</mosaic_0001>

<llo_original>
// kernel: tpu_custom_call.1
$region0: #{tpu_custom_call.1}
  #allocation0 [shape = 'u32[]', space=smem, size = 0x4, offset = 0x4, fixed_abs, tag = 'smem constant byte address 0x4 - core index']
  #allocation1 [shape = 'u32[144,128]{1,0:T(1,128)}', space=vmem, size = 0x12000, scoped, tag = 'internal scratch']
  %s0 = inlined_call_operand.vmem [shape: f32[2,8,32], index: 0, kind: input, shape index: {}]
  %s1 = inlined_call_operand.vmem [shape: f32[1,32], index: 1, kind: input, shape index: {}]
  %s2 = inlined_call_operand.vmem [shape: f32[1,32], index: 2, kind: input, shape index: {}]
  %s3 = inlined_call_operand.vmem [shape: bf16[32,96], index: 3, kind: input, shape index: {}]
  %s4 = inlined_call_operand.vmem [shape: bf16[32,32], index: 4, kind: input, shape index: {}]
  %s5 = inlined_call_operand.vmem [shape: f32[1,32], index: 5, kind: input, shape index: {}]
  %s6 = inlined_call_operand.vmem [shape: f32[1,32], index: 6, kind: input, shape index: {}]
  %s7 = inlined_call_operand.vmem [shape: f32[1,32], index: 7, kind: input, shape index: {}]
  %s8 = inlined_call_operand.vmem [shape: bf16[32,128], index: 8, kind: input, shape index: {}]
  %s9 = inlined_call_operand.vmem [shape: f32[1,128], index: 9, kind: input, shape index: {}]
  %s10 = inlined_call_operand.vmem [shape: bf16[128,32], index: 10, kind: input, shape index: {}]
  %s11 = inlined_call_operand.vmem [shape: f32[1,32], index: 11, kind: input, shape index: {}]
  %s12 = inlined_call_operand.hbm [shape: f32[2,8,32], index: 12, kind: output, shape index: {}]
  %s13 = sld [smem:[#allocation0]]
  $region81: #{tpu_custom_call.1} parent=0
    _
  %s15 = ssub.s32 1, %s13
  %s16 = scalar_select 0, %s15, %s13
  $region1: #{tpu_custom_call.1} parent=0
    #allocation2 [shape = 'u8[8192]{0}', space=vmem, size = 0x2000, scoped, tag = 'output window, operand 0']
    #allocation3 [shape = 's32[2]{0}', space=sflag, size = 0x8, scoped, tag = 'scoped memory for tpu_custom_call.1']
    %17 = vsyncpa [#allocation3], 0
    %s18 = scalar_lea.sflag [#allocation3], 1
    %19 = vsyncpa %s18, 0
    loop: start=0, step=1, limit=4
    $region2: #{tpu_custom_call.1} parent=1 // loop_pre_header
      _
    $region3: #{tpu_custom_call.1} parent=1 // loop_header
      %s21 = sphi 0, %s25
      %p22 = scmp.ge.s32.totalorder %s21, 4
      %s31 = sphi 0, %s33
      %s34 = sphi 0, %s31
      %s35 = sphi 0, %s34
      %s51 = sphi 0, %s35
      %s55 = sphi 0, %s55
      %s57 = sphi 0, %s55
      %s58 = sphi 0, %s57
      %s72 = sphi 0, %s58
      %s76 = sphi 0, %s76
      %s78 = sphi 0, %s76
      %s79 = sphi 0, %s78
      %s93 = sphi 0, %s79
      %s97 = sphi 0, %s97
      %s99 = sphi 0, %s97
      %s100 = sphi 0, %s99
      %s114 = sphi 0, %s100
      %s118 = sphi 0, %s118
      %s120 = sphi 0, %s118
      %s121 = sphi 0, %s120
      %s135 = sphi 0, %s121
      %s139 = sphi 0, %s139
      %s141 = sphi 0, %s139
      %s142 = sphi 0, %s141
      %s156 = sphi 0, %s142
      %s160 = sphi 0, %s160
      %s162 = sphi 0, %s160
      %s163 = sphi 0, %s162
      %s177 = sphi 0, %s163
      %s181 = sphi 0, %s181
      %s183 = sphi 0, %s181
      %s184 = sphi 0, %s183
      %s198 = sphi 0, %s184
      %s202 = sphi 0, %s202
      %s204 = sphi 0, %s202
      %s205 = sphi 0, %s204
      %s219 = sphi 0, %s205
      %s223 = sphi 0, %s223
      %s225 = sphi 0, %s223
      %s226 = sphi 0, %s225
      %s240 = sphi 0, %s226
      %s244 = sphi 0, %s244
      %s246 = sphi 0, %s244
      %s247 = sphi 0, %s246
      %s261 = sphi 0, %s247
      %s265 = sphi 0, %s265
      %s267 = sphi 0, %s265
      %s268 = sphi 0, %s267
      %s282 = sphi 0, %s268
      %s288 = sphi 0, %s290
      %s291 = sphi 0, %s288
      %s292 = sphi 0, %s291
      %s308 = sphi 0, %s292
    $region4: #{tpu_custom_call.1} parent=1 // loop_header_branch
      %24 = sbr.rel (%p22) target = $region8
    $region5: #{tpu_custom_call.1} parent=1 // loop_body
      %s26 = ssub.s32 %s21, 1
      %s27 = ssub.s32 %s21, 2
      %s28 = sadd.s32 %s21, 1
      %s29 = ssub.s32 %s21, %s28
      %p30 = scmp.eq.s32.totalorder %s29, 0
      %s32 = sadd.s32 %s31, 1
      %s33 = scalar_select %p30, %s31, %s32
      %p36 = pneg %p30
      %p37 = scmp.eq.s32.totalorder %s21, 1
      %p38 = por %p36, %p37
      %p39 = scmp.ne.s32.totalorder %s31, %s34
      %p40 = scmp.eq.s32.totalorder %s21, 0
      %p41 = por %p39, %p40
      %p42 = scmp.ne.s32.totalorder %s31, %s34
      %p43 = scmp.eq.s32.totalorder %s26, 1
      %p44 = por %p42, %p43
      %p45 = scmp.ne.s32.totalorder %s34, %s35
      %p46 = scmp.eq.s32.totalorder %s26, 0
      %p47 = por %p45, %p46
      %p48 = scmp.ne.s32.totalorder %s34, %s35
      %p49 = scmp.eq.s32.totalorder %s27, 1
      %p50 = por %p48, %p49
      %p52 = scmp.ne.s32.totalorder %s35, %s51
      %p53 = scmp.eq.s32.totalorder %s27, 0
      %p54 = por %p52, %p53
      %s56 = sadd.s32 %s55, 1
      %p59 = scmp.eq.s32.totalorder %s21, 1
      %p60 = scmp.ne.s32.totalorder %s55, %s57
      %p61 = scmp.eq.s32.totalorder %s21, 0
      %p62 = por %p60, %p61
      %p63 = scmp.ne.s32.totalorder %s55, %s57
      %p64 = scmp.eq.s32.totalorder %s26, 1
      %p65 = por %p63, %p64
      %p66 = scmp.ne.s32.totalorder %s57, %s58
      %p67 = scmp.eq.s32.totalorder %s26, 0
      %p68 = por %p66, %p67
      %p69 = scmp.ne.s32.totalorder %s57, %s58
      %p70 = scmp.eq.s32.totalorder %s27, 1
      %p71 = por %p69, %p70
      %p73 = scmp.ne.s32.totalorder %s58, %s72
      %p74 = scmp.eq.s32.totalorder %s27, 0
      %p75 = por %p73, %p74
      %s77 = sadd.s32 %s76, 1
      %p80 = scmp.eq.s32.totalorder %s21, 1
      %p81 = scmp.ne.s32.totalorder %s76, %s78
      %p82 = scmp.eq.s32.totalorder %s21, 0
      %p83 = por %p81, %p82
      %p84 = scmp.ne.s32.totalorder %s76, %s78
      %p85 = scmp.eq.s32.totalorder %s26, 1
      %p86 = por %p84, %p85
      %p87 = scmp.ne.s32.totalorder %s78, %s79
      %p88 = scmp.eq.s32.totalorder %s26, 0
      %p89 = por %p87, %p88
      %p90 = scmp.ne.s32.totalorder %s78, %s79
      %p91 = scmp.eq.s32.totalorder %s27, 1
      %p92 = por %p90, %p91
      %p94 = scmp.ne.s32.totalorder %s79, %s93
      %p95 = scmp.eq.s32.totalorder %s27, 0
      %p96 = por %p94, %p95
      %s98 = sadd.s32 %s97, 1
      %p101 = scmp.eq.s32.totalorder %s21, 1
      %p102 = scmp.ne.s32.totalorder %s97, %s99
      %p103 = scmp.eq.s32.totalorder %s21, 0
      %p104 = por %p102, %p103
      %p105 = scmp.ne.s32.totalorder %s97, %s99
      %p106 = scmp.eq.s32.totalorder %s26, 1
      %p107 = por %p105, %p106
      %p108 = scmp.ne.s32.totalorder %s99, %s100
      %p109 = scmp.eq.s32.totalorder %s26, 0
      %p110 = por %p108, %p109
      %p111 = scmp.ne.s32.totalorder %s99, %s100
      %p112 = scmp.eq.s32.totalorder %s27, 1
      %p113 = por %p111, %p112
      %p115 = scmp.ne.s32.totalorder %s100, %s114
      %p116 = scmp.eq.s32.totalorder %s27, 0
      %p117 = por %p115, %p116
      %s119 = sadd.s32 %s118, 1
      %p122 = scmp.eq.s32.totalorder %s21, 1
      %p123 = scmp.ne.s32.totalorder %s118, %s120
      %p124 = scmp.eq.s32.totalorder %s21, 0
      %p125 = por %p123, %p124
      %p126 = scmp.ne.s32.totalorder %s118, %s120
      %p127 = scmp.eq.s32.totalorder %s26, 1
      %p128 = por %p126, %p127
      %p129 = scmp.ne.s32.totalorder %s120, %s121
      %p130 = scmp.eq.s32.totalorder %s26, 0
      %p131 = por %p129, %p130
      %p132 = scmp.ne.s32.totalorder %s120, %s121
      %p133 = scmp.eq.s32.totalorder %s27, 1
      %p134 = por %p132, %p133
      %p136 = scmp.ne.s32.totalorder %s121, %s135
      %p137 = scmp.eq.s32.totalorder %s27, 0
      %p138 = por %p136, %p137
      %s140 = sadd.s32 %s139, 1
      %p143 = scmp.eq.s32.totalorder %s21, 1
      %p144 = scmp.ne.s32.totalorder %s139, %s141
      %p145 = scmp.eq.s32.totalorder %s21, 0
      %p146 = por %p144, %p145
      %p147 = scmp.ne.s32.totalorder %s139, %s141
      %p148 = scmp.eq.s32.totalorder %s26, 1
      %p149 = por %p147, %p148
      %p150 = scmp.ne.s32.totalorder %s141, %s142
      %p151 = scmp.eq.s32.totalorder %s26, 0
      %p152 = por %p150, %p151
      %p153 = scmp.ne.s32.totalorder %s141, %s142
      %p154 = scmp.eq.s32.totalorder %s27, 1
      %p155 = por %p153, %p154
      %p157 = scmp.ne.s32.totalorder %s142, %s156
      %p158 = scmp.eq.s32.totalorder %s27, 0
      %p159 = por %p157, %p158
      %s161 = sadd.s32 %s160, 1
      %p164 = scmp.eq.s32.totalorder %s21, 1
      %p165 = scmp.ne.s32.totalorder %s160, %s162
      %p166 = scmp.eq.s32.totalorder %s21, 0
      %p167 = por %p165, %p166
      %p168 = scmp.ne.s32.totalorder %s160, %s162
      %p169 = scmp.eq.s32.totalorder %s26, 1
      %p170 = por %p168, %p169
      %p171 = scmp.ne.s32.totalorder %s162, %s163
      %p172 = scmp.eq.s32.totalorder %s26, 0
      %p173 = por %p171, %p172
      %p174 = scmp.ne.s32.totalorder %s162, %s163
      %p175 = scmp.eq.s32.totalorder %s27, 1
      %p176 = por %p174, %p175
      %p178 = scmp.ne.s32.totalorder %s163, %s177
      %p179 = scmp.eq.s32.totalorder %s27, 0
      %p180 = por %p178, %p179
      %s182 = sadd.s32 %s181, 1
      %p185 = scmp.eq.s32.totalorder %s21, 1
      %p186 = scmp.ne.s32.totalorder %s181, %s183
      %p187 = scmp.eq.s32.totalorder %s21, 0
      %p188 = por %p186, %p187
      %p189 = scmp.ne.s32.totalorder %s181, %s183
      %p190 = scmp.eq.s32.totalorder %s26, 1
      %p191 = por %p189, %p190
      %p192 = scmp.ne.s32.totalorder %s183, %s184
      %p193 = scmp.eq.s32.totalorder %s26, 0
      %p194 = por %p192, %p193
      %p195 = scmp.ne.s32.totalorder %s183, %s184
      %p196 = scmp.eq.s32.totalorder %s27, 1
      %p197 = por %p195, %p196
      %p199 = scmp.ne.s32.totalorder %s184, %s198
      %p200 = scmp.eq.s32.totalorder %s27, 0
      %p201 = por %p199, %p200
      %s203 = sadd.s32 %s202, 1
      %p206 = scmp.eq.s32.totalorder %s21, 1
      %p207 = scmp.ne.s32.totalorder %s202, %s204
      %p208 = scmp.eq.s32.totalorder %s21, 0
      %p209 = por %p207, %p208
      %p210 = scmp.ne.s32.totalorder %s202, %s204
      %p211 = scmp.eq.s32.totalorder %s26, 1
      %p212 = por %p210, %p211
      %p213 = scmp.ne.s32.totalorder %s204, %s205
      %p214 = scmp.eq.s32.totalorder %s26, 0
      %p215 = por %p213, %p214
      %p216 = scmp.ne.s32.totalorder %s204, %s205
      %p217 = scmp.eq.s32.totalorder %s27, 1
      %p218 = por %p216, %p217
      %p220 = scmp.ne.s32.totalorder %s205, %s219
      %p221 = scmp.eq.s32.totalorder %s27, 0
      %p222 = por %p220, %p221
      %s224 = sadd.s32 %s223, 1
      %p227 = scmp.eq.s32.totalorder %s21, 1
      %p228 = scmp.ne.s32.totalorder %s223, %s225
      %p229 = scmp.eq.s32.totalorder %s21, 0
      %p230 = por %p228, %p229
      %p231 = scmp.ne.s32.totalorder %s223, %s225
      %p232 = scmp.eq.s32.totalorder %s26, 1
      %p233 = por %p231, %p232
      %p234 = scmp.ne.s32.totalorder %s225, %s226
      %p235 = scmp.eq.s32.totalorder %s26, 0
      %p236 = por %p234, %p235
      %p237 = scmp.ne.s32.totalorder %s225, %s226
      %p238 = scmp.eq.s32.totalorder %s27, 1
      %p239 = por %p237, %p238
      %p241 = scmp.ne.s32.totalorder %s226, %s240
      %p242 = scmp.eq.s32.totalorder %s27, 0
      %p243 = por %p241, %p242
      %s245 = sadd.s32 %s244, 1
      %p248 = scmp.eq.s32.totalorder %s21, 1
      %p249 = scmp.ne.s32.totalorder %s244, %s246
      %p250 = scmp.eq.s32.totalorder %s21, 0
      %p251 = por %p249, %p250
      %p252 = scmp.ne.s32.totalorder %s244, %s246
      %p253 = scmp.eq.s32.totalorder %s26, 1
      %p254 = por %p252, %p253
      %p255 = scmp.ne.s32.totalorder %s246, %s247
      %p256 = scmp.eq.s32.totalorder %s26, 0
      %p257 = por %p255, %p256
      %p258 = scmp.ne.s32.totalorder %s246, %s247
      %p259 = scmp.eq.s32.totalorder %s27, 1
      %p260 = por %p258, %p259
      %p262 = scmp.ne.s32.totalorder %s247, %s261
      %p263 = scmp.eq.s32.totalorder %s27, 0
      %p264 = por %p262, %p263
      %s266 = sadd.s32 %s265, 1
      %p269 = scmp.eq.s32.totalorder %s21, 1
      %p270 = scmp.ne.s32.totalorder %s265, %s267
      %p271 = scmp.eq.s32.totalorder %s21, 0
      %p272 = por %p270, %p271
      %p273 = scmp.ne.s32.totalorder %s265, %s267
      %p274 = scmp.eq.s32.totalorder %s26, 1
      %p275 = por %p273, %p274
      %p276 = scmp.ne.s32.totalorder %s267, %s268
      %p277 = scmp.eq.s32.totalorder %s26, 0
      %p278 = por %p276, %p277
      %p279 = scmp.ne.s32.totalorder %s267, %s268
      %p280 = scmp.eq.s32.totalorder %s27, 1
      %p281 = por %p279, %p280
      %p283 = scmp.ne.s32.totalorder %s268, %s282
      %p284 = scmp.eq.s32.totalorder %s27, 0
      %p285 = por %p283, %p284
      %s286 = ssub.s32 %s21, %s28
      %p287 = scmp.eq.s32.totalorder %s286, 0
      %s289 = sadd.s32 %s288, 1
      %s290 = scalar_select %p287, %s288, %s289
      %p293 = pneg %p287
      %p294 = scmp.eq.s32.totalorder %s21, 1
      %p295 = por %p293, %p294
      %p296 = scmp.ne.s32.totalorder %s288, %s291
      %p297 = scmp.eq.s32.totalorder %s21, 0
      %p298 = por %p296, %p297
      %p299 = scmp.ne.s32.totalorder %s288, %s291
      %p300 = scmp.eq.s32.totalorder %s26, 1
      %p301 = por %p299, %p300
      %p302 = scmp.ne.s32.totalorder %s291, %s292
      %p303 = scmp.eq.s32.totalorder %s26, 0
      %p304 = por %p302, %p303
      %p305 = scmp.ne.s32.totalorder %s291, %s292
      %p306 = scmp.eq.s32.totalorder %s27, 1
      %p307 = por %p305, %p306
      %p309 = scmp.ne.s32.totalorder %s292, %s308
      %p310 = scmp.eq.s32.totalorder %s27, 0
      %p311 = por %p309, %p310
      %p312 = scmp.le.s32.totalorder 1, %s21
      %p313 = scmp.lt.s32.totalorder %s21, 3
      %p314 = pnand %p312, %p313
      %p315 = pneg %p314
      // Predicated region
      $region9: #{tpu_custom_call.1} parent=5 // pred_check
        _
      $region10: #{tpu_custom_call.1} parent=5 // pred_check_branch
        %317 = sbr.rel (%p314) target = $region12
      $region11: #{tpu_custom_call.1} parent=5 // pred_region
        %s318 = ssub.s32 %s21, 1
        // Predicated region
        $region13: #{tpu_custom_call.1} parent=11 // pred_check
          %p319 = pneg %p68
        $region14: #{tpu_custom_call.1} parent=11 // pred_check_branch
          %321 = sbr.rel (%p319) target = $region16
        $region15: #{tpu_custom_call.1} parent=11 // pred_region
          _
        $region16: #{tpu_custom_call.1} parent=11 // pred_fallthru
          _
        // Predicated region
        $region17: #{tpu_custom_call.1} parent=11 // pred_check
          %p322 = pneg %p89
        $region18: #{tpu_custom_call.1} parent=11 // pred_check_branch
          %324 = sbr.rel (%p322) target = $region20
        $region19: #{tpu_custom_call.1} parent=11 // pred_region
          _
        $region20: #{tpu_custom_call.1} parent=11 // pred_fallthru
          _
        // Predicated region
        $region21: #{tpu_custom_call.1} parent=11 // pred_check
          %p325 = pneg %p110
        $region22: #{tpu_custom_call.1} parent=11 // pred_check_branch
          %327 = sbr.rel (%p325) target = $region24
        $region23: #{tpu_custom_call.1} parent=11 // pred_region
          _
        $region24: #{tpu_custom_call.1} parent=11 // pred_fallthru
          _
        // Predicated region
        $region25: #{tpu_custom_call.1} parent=11 // pred_check
          %p328 = pneg %p131
        $region26: #{tpu_custom_call.1} parent=11 // pred_check_branch
          %330 = sbr.rel (%p328) target = $region28
        $region27: #{tpu_custom_call.1} parent=11 // pred_region
          _
        $region28: #{tpu_custom_call.1} parent=11 // pred_fallthru
          _
        // Predicated region
        $region29: #{tpu_custom_call.1} parent=11 // pred_check
          %p331 = pneg %p152
        $region30: #{tpu_custom_call.1} parent=11 // pred_check_branch
          %333 = sbr.rel (%p331) target = $region32
        $region31: #{tpu_custom_call.1} parent=11 // pred_region
          _
        $region32: #{tpu_custom_call.1} parent=11 // pred_fallthru
          _
        // Predicated region
        $region33: #{tpu_custom_call.1} parent=11 // pred_check
          %p334 = pneg %p173
        $region34: #{tpu_custom_call.1} parent=11 // pred_check_branch
          %336 = sbr.rel (%p334) target = $region36
        $region35: #{tpu_custom_call.1} parent=11 // pred_region
          _
        $region36: #{tpu_custom_call.1} parent=11 // pred_fallthru
          _
        // Predicated region
        $region37: #{tpu_custom_call.1} parent=11 // pred_check
          %p337 = pneg %p194
        $region38: #{tpu_custom_call.1} parent=11 // pred_check_branch
          %339 = sbr.rel (%p337) target = $region40
        $region39: #{tpu_custom_call.1} parent=11 // pred_region
          _
        $region40: #{tpu_custom_call.1} parent=11 // pred_fallthru
          _
        // Predicated region
        $region41: #{tpu_custom_call.1} parent=11 // pred_check
          %p340 = pneg %p215
        $region42: #{tpu_custom_call.1} parent=11 // pred_check_branch
          %342 = sbr.rel (%p340) target = $region44
        $region43: #{tpu_custom_call.1} parent=11 // pred_region
          _
        $region44: #{tpu_custom_call.1} parent=11 // pred_fallthru
          _
        // Predicated region
        $region45: #{tpu_custom_call.1} parent=11 // pred_check
          %p343 = pneg %p236
        $region46: #{tpu_custom_call.1} parent=11 // pred_check_branch
          %345 = sbr.rel (%p343) target = $region48
        $region47: #{tpu_custom_call.1} parent=11 // pred_region
          _
        $region48: #{tpu_custom_call.1} parent=11 // pred_fallthru
          _
        // Predicated region
        $region49: #{tpu_custom_call.1} parent=11 // pred_check
          %p346 = pneg %p257
        $region50: #{tpu_custom_call.1} parent=11 // pred_check_branch
          %348 = sbr.rel (%p346) target = $region52
        $region51: #{tpu_custom_call.1} parent=11 // pred_region
          _
        $region52: #{tpu_custom_call.1} parent=11 // pred_fallthru
          _
        // Predicated region
        $region53: #{tpu_custom_call.1} parent=11 // pred_check
          %p349 = pneg %p278
        $region54: #{tpu_custom_call.1} parent=11 // pred_check_branch
          %351 = sbr.rel (%p349) target = $region56
        $region55: #{tpu_custom_call.1} parent=11 // pred_region
          _
        $region56: #{tpu_custom_call.1} parent=11 // pred_fallthru
          _
      $region12: #{tpu_custom_call.1} parent=5 // pred_fallthru
        _
      %p352 = scmp.lt.s32.totalorder %s21, 2
      // Predicated region
      $region57: #{tpu_custom_call.1} parent=5 // pred_check
        %p353 = pneg %p352
      $region58: #{tpu_custom_call.1} parent=5 // pred_check_branch
        %355 = sbr.rel (%p353) target = $region60
      $region59: #{tpu_custom_call.1} parent=5 // pred_region
        // Predicated region
        $region61: #{tpu_custom_call.1} parent=59 // pred_check
          %p356 = pneg %p41
        $region62: #{tpu_custom_call.1} parent=59 // pred_check_branch
          %358 = sbr.rel (%p356) target = $region64
        $region63: #{tpu_custom_call.1} parent=59 // pred_region
          %p359 = scmp.lt.s32.totalorder %s21, 1
          %s360 = scalar_select %p359, %s21, 1
          %s361 = smul.addr %s360, 8
          %s362 = scalar_lea.vmem %s0, %s361
        $region64: #{tpu_custom_call.1} parent=59 // pred_fallthru
          _
      $region60: #{tpu_custom_call.1} parent=5 // pred_fallthru
        _
      %p363 = scmp.le.s32.totalorder 1, %s21
      %p364 = scmp.lt.s32.totalorder %s21, 3
      %p365 = pnand %p363, %p364
      %p366 = pneg %p365
      // Predicated region
      $region65: #{tpu_custom_call.1} parent=5 // pred_check
        _
      $region66: #{tpu_custom_call.1} parent=5 // pred_check_branch
        %368 = sbr.rel (%p365) target = $region68
      $region67: #{tpu_custom_call.1} parent=5 // pred_region
        %s369 = ssub.s32 %s21, 1
        %p370 = scmp.lt.s32.totalorder %s26, 1
        %s371 = scalar_select %p370, %s26, 1
        %s372 = smul.addr %s371, 8
        %s373 = scalar_lea.vmem %s0, %s372
        %p374 = pneg %p47
        %p375 = pneg %p44
        %p376 = pneg %p68
        %p377 = pneg %p65
        %p378 = pneg %p89
        %p379 = pneg %p86
        %p380 = pneg %p110
        %p381 = pneg %p107
        %p382 = pneg %p131
        %p383 = pneg %p128
        %p384 = pneg %p152
        %p385 = pneg %p149
        %p386 = pneg %p173
        %p387 = pneg %p170
        %p388 = pneg %p194
        %p389 = pneg %p191
        %p390 = pneg %p215
        %p391 = pneg %p212
        %p392 = pneg %p236
        %p393 = pneg %p233
        %p394 = pneg %p257
        %p395 = pneg %p254
        %p396 = pneg %p278
        %p397 = pneg %p275
        %p398 = pneg %p304
        %p399 = pneg %p301
        %s400 = sand.u32 %s291, 1
        %s401 = scalar_lea.sflag [#allocation3], %s400
        %s402 = sand.u32 %s291, 1
        %s403 = smul.addr %s402, 8
        %s404 = scalar_lea.vmem [#allocation2], %s403
        %p405 = scmp.lt.s32.totalorder %s26, 1
        %s406 = scalar_select %p405, %s26, 1
        %s407 = smul.addr %s406, 8
        %s408 = scalar_lea.vmem %s0, %s407
        %v414 = vld [vmem:[%s408] sm:$0xff]
        %v415 = vld [vmem:[%s1] sm:$0x1]
        %v416 = vld [vmem:[%s2] sm:$0x1]
        %vm417 = vcmask 261120
        %v418 = vsel %vm417, %v414, 0.0
        %419 = vadd.xlane.f32.xlu0 %v418
        %v420 = vpop.xlane.xlu0 %419
        %v421 = vrcp.pop 32.0
        %v422 = vmul.f32 %v420, %v421
        %v423 = vsub.f32 %v414, %v422
        %v424 = vmul.f32 %v423, %v423
        %v425 = vsel %vm417, %v424, 0.0
        %426 = vadd.xlane.f32.xlu0 %v425
        %v427 = vpop.xlane.xlu0 %426
        %v428 = vmul.f32 %v427, %v421
        %v429 = vadd.f32 %v428, 1e-05
        %v430 = vrsqrt.pop %v429
        %v431 = vmul.f32 %v423, %v430
        %v433 = vlaneseq
        %v434 = vshrl.u32 %v433, 7
        %v435 = vsub.s32 0, %v434
        %v436 = vrot.slane %v415, %v435
        %v438 = vmul.f32 %v431, %v436
        %v440 = vlaneseq
        %v441 = vshrl.u32 %v440, 7
        %v442 = vsub.s32 0, %v441
        %v443 = vrot.slane %v416, %v442
        %v445 = vadd.f32 %v438, %v443
        %v446 = vpack.c.bf16 %v445, %v445
        %v447 = vld [vmem:[%s3] sm:$0xf]
        %v448 = vld [vmem:[%s3 + $0x4] sm:$0xf]
        %v449 = vld [vmem:[%s3 + $0x8] sm:$0xf]
        %v450 = vld [vmem:[%s3 + $0xc] sm:$0xf]
        %v455 = vunpack.c.l.b16 %v447
        %v456 = vunpack.c.l.b16 %v448
        %v457 = vunpack.c.l.b16 %v449
        %v458 = vunpack.c.l.b16 %v450
        %v459 = vpack.c.b16 %v456, %v455
        %v460 = vpack.c.b16 %v458, %v457
        %v464 = vsel %vm417, %v446, 0
        %466 = vmatprep.subr.bf16.mxu0 0
        %467 = vmatpush1.bf16.msra.mxu0 %v459
        %468 = vmatprep.subr.bf16.mxu0 0
        %469 = vmatpush1.bf16.msra.mxu0 %v460
        %470 = vmatprep.subr.bf16.mxu0 0
        %471 = vmatpush1.bf16.msra.mxu0 0
        %472 = vmatprep.subr.bf16.mxu0 0
        %473 = vmatpush1.bf16.msra.mxu0 0
        %474 = vmatprep.subr.bf16.mxu0 0
        %475 = vmatpush1.bf16.msra.mxu0 0
        %476 = vmatprep.subr.bf16.mxu0 0
        %477 = vmatpush1.bf16.msra.mxu0 0
        %478 = vmatprep.subr.bf16.mxu0 0
        %479 = vmatpush1.bf16.msra.mxu0 0
        %480 = vmatprep.subr.bf16.mxu0 0
        %481 = vmatpush1.bf16.msra.mxu0 0
        %482 = vmatprep.subr.bf16.mxu0 0
        %483 = vmatpush1.bf16.msra.mxu0 0
        %484 = vmatprep.subr.bf16.mxu0 0
        %485 = vmatpush1.bf16.msra.mxu0 0
        %486 = vmatprep.subr.bf16.mxu0 0
        %487 = vmatpush1.bf16.msra.mxu0 0
        %488 = vmatprep.subr.bf16.mxu0 0
        %489 = vmatpush1.bf16.msra.mxu0 0
        %490 = vmatprep.subr.bf16.mxu0 0
        %491 = vmatpush1.bf16.msra.mxu0 0
        %492 = vmatprep.subr.bf16.mxu0 0
        %493 = vmatpush1.bf16.msra.mxu0 0
        %494 = vmatprep.subr.bf16.mxu0 0
        %495 = vmatpush1.bf16.msra.mxu0 0
        %496 = vmatprep.subr.bf16.mxu0 0
        %497 = vmatpush1.bf16.msra.mxu0 0
        %498 = vmatprep.mubr.bf16.mxu0 0
        %499 = vmatmul.mubr.bf16.gmra.mrb[0].mxu0 %v464
        %v500 = vpop.f32.mrb[0].mxu0
        %v501 = vadd.f32 0.0, %v500
        %v502 = vpop.f32.mrb[0].mxu0
        %v503 = vpop.f32.mrb[0].mxu0
        %v504 = vpop.f32.mrb[0].mxu0
        %505 = vdwg.mxu0
        %v506 = vpack.c.bf16 %v501, %v501
        %508 = vrot.lane.b32.xlu0 %v506, 120
        %v509 = vpop.permute.xlu0 %508
        %510 = vrot.lane.b32.xlu0 %v506, 112
        %v511 = vpop.permute.xlu0 %510
        %512 = vrot.lane.b32.xlu0 %v506, 104
        %v513 = vpop.permute.xlu0 %512
        %v515 = vunpack.c.l.s4 1983009808
        %v516 = vunpack.c.0.s8 %v515
        %v517 = vlaneseq
        %v518 = vshrl.u32 %v517, 7
        %v519 = vsub.s32 %v516, %v518
        %v520 = vrot.slane %v506, %v519
        %v523 = vunpack.c.l.s4 1983009808
        %v524 = vunpack.c.0.s8 %v523
        %v525 = vlaneseq
        %v526 = vshrl.u32 %v525, 7
        %v527 = vsub.s32 %v524, %v526
        %v528 = vrot.slane %v511, %v527
        %v529 = vcombine.low %v520, %v528
        %v530 = vcombine.high %v520, %v528
        %v532 = vunpack.c.l.s4 1934713408
        %v533 = vunpack.c.0.s8 %v532
        %v534 = vlaneseq
        %v535 = vshrl.u32 %v534, 7
        %v536 = vsub.s32 %v533, %v535
        %v537 = vrot.slane %v529, %v536
        %v539 = vunpack.c.l.s4 1934713408
        %v540 = vunpack.c.0.s8 %v539
        %v541 = vlaneseq
        %v542 = vshrl.u32 %v541, 7
        %v543 = vsub.s32 %v540, %v542
        %v544 = vrot.slane %v530, %v543
        %v545 = vcombine.high %v537, 0
        %v546 = vcombine.high %v544, 0
        %v549 = vunpack.c.l.s4 1983009808
        %v550 = vunpack.c.0.s8 %v549
        %v551 = vlaneseq
        %v552 = vshrl.u32 %v551, 7
        %v553 = vsub.s32 %v550, %v552
        %v554 = vrot.slane %v509, %v553
        %v557 = vunpack.c.l.s4 1983009808
        %v558 = vunpack.c.0.s8 %v557
        %v559 = vlaneseq
        %v560 = vshrl.u32 %v559, 7
        %v561 = vsub.s32 %v558, %v560
        %v562 = vrot.slane %v513, %v561
        %v563 = vcombine.low %v554, %v562
        %v564 = vcombine.high %v554, %v562
        %v566 = vunpack.c.l.s4 1934713408
        %v567 = vunpack.c.0.s8 %v566
        %v568 = vlaneseq
        %v569 = vshrl.u32 %v568, 7
        %v570 = vsub.s32 %v567, %v569
        %v571 = vrot.slane %v563, %v570
        %v573 = vunpack.c.l.s4 1934713408
        %v574 = vunpack.c.0.s8 %v573
        %v575 = vlaneseq
        %v576 = vshrl.u32 %v575, 7
        %v577 = vsub.s32 %v574, %v576
        %v578 = vrot.slane %v564, %v577
        %v579 = vcombine.high %v571, 0
        %v580 = vcombine.high %v578, 0
        %v583 = vpack.i.b16 %v571, %v537
        %v585 = vshrl.u32 %v537, 16
        %v586 = vshrl.u32 %v571, 16
        %v587 = vpack.i.b16 %v586, %v585
        %v591 = vpack.i.b16 %v579, %v545
        %v593 = vshrl.u32 %v545, 16
        %v594 = vshrl.u32 %v579, 16
        %v595 = vpack.i.b16 %v594, %v593
        %v599 = vpack.i.b16 %v578, %v544
        %v601 = vshrl.u32 %v544, 16
        %v602 = vshrl.u32 %v578, 16
        %v603 = vpack.i.b16 %v602, %v601
        %v607 = vpack.i.b16 %v580, %v546
        %v609 = vshrl.u32 %v546, 16
        %v610 = vshrl.u32 %v580, 16
        %v611 = vpack.i.b16 %v610, %v609
        %v613 = vcombine.low %v583, %v599
        %v615 = vunpack.c.l.s4 1983009808
        %v616 = vunpack.c.0.s8 %v615
        %v617 = vlaneseq
        %v618 = vshrl.u32 %v617, 7
        %v619 = vsub.s32 %v616, %v618
        %v620 = vrot.slane %v613, %v619
        %v621 = vcombine.low %v591, %v607
        %v623 = vunpack.c.l.s4 1983009808
        %v624 = vunpack.c.0.s8 %v623
        %v625 = vlaneseq
        %v626 = vshrl.u32 %v625, 7
        %v627 = vsub.s32 %v624, %v626
        %v628 = vrot.slane %v621, %v627
        %v629 = vcombine.low %v620, %v628
        %v631 = vunpack.c.l.s4 1934713408
        %v632 = vunpack.c.0.s8 %v631
        %v633 = vlaneseq
        %v634 = vshrl.u32 %v633, 7
        %v635 = vsub.s32 %v632, %v634
        %v636 = vrot.slane %v629, %v635
        %v637 = vcombine.high %v636, 0
        %v638 = vcombine.low %v587, %v603
        %v640 = vunpack.c.l.s4 1983009808
        %v641 = vunpack.c.0.s8 %v640
        %v642 = vlaneseq
        %v643 = vshrl.u32 %v642, 7
        %v644 = vsub.s32 %v641, %v643
        %v645 = vrot.slane %v638, %v644
        %v646 = vcombine.low %v595, %v611
        %v648 = vunpack.c.l.s4 1983009808
        %v649 = vunpack.c.0.s8 %v648
        %v650 = vlaneseq
        %v651 = vshrl.u32 %v650, 7
        %v652 = vsub.s32 %v649, %v651
        %v653 = vrot.slane %v646, %v652
        %v654 = vcombine.low %v645, %v653
        %v656 = vunpack.c.l.s4 1934713408
        %v657 = vunpack.c.0.s8 %v656
        %v658 = vlaneseq
        %v659 = vshrl.u32 %v658, 7
        %v660 = vsub.s32 %v657, %v659
        %v661 = vrot.slane %v654, %v660
        %v662 = vcombine.high %v661, 0
        %v665 = vpack.i.b16 %v661, %v636
        %v666 = vshrl.u32 %v636, 16
        %v667 = vshrl.u32 %v661, 16
        %v668 = vpack.i.b16 %v667, %v666
        %v671 = vpack.i.b16 %v662, %v637
        %v672 = vshrl.u32 %v637, 16
        %v673 = vshrl.u32 %v662, 16
        %v674 = vpack.i.b16 %v673, %v672
        %675 = vrot.lane.b32.xlu0 %v506, 96
        %v676 = vpop.permute.xlu0 %675
        %677 = vrot.lane.b32.xlu0 %v509, 96
        %v678 = vpop.permute.xlu0 %677
        %679 = vrot.lane.b32.xlu0 %v511, 96
        %v680 = vpop.permute.xlu0 %679
        %681 = vrot.lane.b32.xlu0 %v513, 96
        %v682 = vpop.permute.xlu0 %681
        %v685 = vunpack.c.l.s4 1983009808
        %v686 = vunpack.c.0.s8 %v685
        %v687 = vlaneseq
        %v688 = vshrl.u32 %v687, 7
        %v689 = vsub.s32 %v686, %v688
        %v690 = vrot.slane %v676, %v689
        %v693 = vunpack.c.l.s4 1983009808
        %v694 = vunpack.c.0.s8 %v693
        %v695 = vlaneseq
        %v696 = vshrl.u32 %v695, 7
        %v697 = vsub.s32 %v694, %v696
        %v698 = vrot.slane %v680, %v697
        %v699 = vcombine.low %v690, %v698
        %v700 = vcombine.high %v690, %v698
        %v702 = vunpack.c.l.s4 1934713408
        %v703 = vunpack.c.0.s8 %v702
        %v704 = vlaneseq
        %v705 = vshrl.u32 %v704, 7
        %v706 = vsub.s32 %v703, %v705
        %v707 = vrot.slane %v699, %v706
        %v709 = vunpack.c.l.s4 1934713408
        %v710 = vunpack.c.0.s8 %v709
        %v711 = vlaneseq
        %v712 = vshrl.u32 %v711, 7
        %v713 = vsub.s32 %v710, %v712
        %v714 = vrot.slane %v700, %v713
        %v715 = vcombine.high %v707, 0
        %v716 = vcombine.high %v714, 0
        %v719 = vunpack.c.l.s4 1983009808
        %v720 = vunpack.c.0.s8 %v719
        %v721 = vlaneseq
        %v722 = vshrl.u32 %v721, 7
        %v723 = vsub.s32 %v720, %v722
        %v724 = vrot.slane %v678, %v723
        %v727 = vunpack.c.l.s4 1983009808
        %v728 = vunpack.c.0.s8 %v727
        %v729 = vlaneseq
        %v730 = vshrl.u32 %v729, 7
        %v731 = vsub.s32 %v728, %v730
        %v732 = vrot.slane %v682, %v731
        %v733 = vcombine.low %v724, %v732
        %v734 = vcombine.high %v724, %v732
        %v736 = vunpack.c.l.s4 1934713408
        %v737 = vunpack.c.0.s8 %v736
        %v738 = vlaneseq
        %v739 = vshrl.u32 %v738, 7
        %v740 = vsub.s32 %v737, %v739
        %v741 = vrot.slane %v733, %v740
        %v743 = vunpack.c.l.s4 1934713408
        %v744 = vunpack.c.0.s8 %v743
        %v745 = vlaneseq
        %v746 = vshrl.u32 %v745, 7
        %v747 = vsub.s32 %v744, %v746
        %v748 = vrot.slane %v734, %v747
        %v749 = vcombine.high %v741, 0
        %v750 = vcombine.high %v748, 0
        %v753 = vpack.i.b16 %v741, %v707
        %v755 = vshrl.u32 %v707, 16
        %v756 = vshrl.u32 %v741, 16
        %v757 = vpack.i.b16 %v756, %v755
        %v761 = vpack.i.b16 %v749, %v715
        %v763 = vshrl.u32 %v715, 16
        %v764 = vshrl.u32 %v749, 16
        %v765 = vpack.i.b16 %v764, %v763
        %v769 = vpack.i.b16 %v748, %v714
        %v771 = vshrl.u32 %v714, 16
        %v772 = vshrl.u32 %v748, 16
        %v773 = vpack.i.b16 %v772, %v771
        %v777 = vpack.i.b16 %v750, %v716
        %v779 = vshrl.u32 %v716, 16
        %v780 = vshrl.u32 %v750, 16
        %v781 = vpack.i.b16 %v780, %v779
        %v783 = vcombine.low %v753, %v769
        %v785 = vunpack.c.l.s4 1983009808
        %v786 = vunpack.c.0.s8 %v785
        %v787 = vlaneseq
        %v788 = vshrl.u32 %v787, 7
        %v789 = vsub.s32 %v786, %v788
        %v790 = vrot.slane %v783, %v789
        %v791 = vcombine.low %v761, %v777
        %v793 = vunpack.c.l.s4 1983009808
        %v794 = vunpack.c.0.s8 %v793
        %v795 = vlaneseq
        %v796 = vshrl.u32 %v795, 7
        %v797 = vsub.s32 %v794, %v796
        %v798 = vrot.slane %v791, %v797
        %v799 = vcombine.low %v790, %v798
        %v801 = vunpack.c.l.s4 1934713408
        %v802 = vunpack.c.0.s8 %v801
        %v803 = vlaneseq
        %v804 = vshrl.u32 %v803, 7
        %v805 = vsub.s32 %v802, %v804
        %v806 = vrot.slane %v799, %v805
        %v807 = vcombine.high %v806, 0
        %v808 = vcombine.low %v757, %v773
        %v810 = vunpack.c.l.s4 1983009808
        %v811 = vunpack.c.0.s8 %v810
        %v812 = vlaneseq
        %v813 = vshrl.u32 %v812, 7
        %v814 = vsub.s32 %v811, %v813
        %v815 = vrot.slane %v808, %v814
        %v816 = vcombine.low %v765, %v781
        %v818 = vunpack.c.l.s4 1983009808
        %v819 = vunpack.c.0.s8 %v818
        %v820 = vlaneseq
        %v821 = vshrl.u32 %v820, 7
        %v822 = vsub.s32 %v819, %v821
        %v823 = vrot.slane %v816, %v822
        %v824 = vcombine.low %v815, %v823
        %v826 = vunpack.c.l.s4 1934713408
        %v827 = vunpack.c.0.s8 %v826
        %v828 = vlaneseq
        %v829 = vshrl.u32 %v828, 7
        %v830 = vsub.s32 %v827, %v829
        %v831 = vrot.slane %v824, %v830
        %v832 = vcombine.high %v831, 0
        %v835 = vpack.i.b16 %v831, %v806
        %v836 = vshrl.u32 %v806, 16
        %v837 = vshrl.u32 %v831, 16
        %v838 = vpack.i.b16 %v837, %v836
        %v841 = vpack.i.b16 %v832, %v807
        %v842 = vshrl.u32 %v807, 16
        %v843 = vshrl.u32 %v832, 16
        %v844 = vpack.i.b16 %v843, %v842
        %845 = vrot.lane.b32.xlu0 %v506, 64
        %v846 = vpop.permute.xlu0 %845
        %847 = vrot.lane.b32.xlu0 %v509, 64
        %v848 = vpop.permute.xlu0 %847
        %849 = vrot.lane.b32.xlu0 %v511, 64
        %v850 = vpop.permute.xlu0 %849
        %851 = vrot.lane.b32.xlu0 %v513, 64
        %v852 = vpop.permute.xlu0 %851
        %v855 = vunpack.c.l.s4 1983009808
        %v856 = vunpack.c.0.s8 %v855
        %v857 = vlaneseq
        %v858 = vshrl.u32 %v857, 7
        %v859 = vsub.s32 %v856, %v858
        %v860 = vrot.slane %v846, %v859
        %v863 = vunpack.c.l.s4 1983009808
        %v864 = vunpack.c.0.s8 %v863
        %v865 = vlaneseq
        %v866 = vshrl.u32 %v865, 7
        %v867 = vsub.s32 %v864, %v866
        %v868 = vrot.slane %v850, %v867
        %v869 = vcombine.low %v860, %v868
        %v870 = vcombine.high %v860, %v868
        %v872 = vunpack.c.l.s4 1934713408
        %v873 = vunpack.c.0.s8 %v872
        %v874 = vlaneseq
        %v875 = vshrl.u32 %v874, 7
        %v876 = vsub.s32 %v873, %v875
        %v877 = vrot.slane %v869, %v876
        %v879 = vunpack.c.l.s4 1934713408
        %v880 = vunpack.c.0.s8 %v879
        %v881 = vlaneseq
        %v882 = vshrl.u32 %v881, 7
        %v883 = vsub.s32 %v880, %v882
        %v884 = vrot.slane %v870, %v883
        %v885 = vcombine.high %v877, 0
        %v886 = vcombine.high %v884, 0
        %v889 = vunpack.c.l.s4 1983009808
        %v890 = vunpack.c.0.s8 %v889
        %v891 = vlaneseq
        %v892 = vshrl.u32 %v891, 7
        %v893 = vsub.s32 %v890, %v892
        %v894 = vrot.slane %v848, %v893
        %v897 = vunpack.c.l.s4 1983009808
        %v898 = vunpack.c.0.s8 %v897
        %v899 = vlaneseq
        %v900 = vshrl.u32 %v899, 7
        %v901 = vsub.s32 %v898, %v900
        %v902 = vrot.slane %v852, %v901
        %v903 = vcombine.low %v894, %v902
        %v904 = vcombine.high %v894, %v902
        %v906 = vunpack.c.l.s4 1934713408
        %v907 = vunpack.c.0.s8 %v906
        %v908 = vlaneseq
        %v909 = vshrl.u32 %v908, 7
        %v910 = vsub.s32 %v907, %v909
        %v911 = vrot.slane %v903, %v910
        %v913 = vunpack.c.l.s4 1934713408
        %v914 = vunpack.c.0.s8 %v913
        %v915 = vlaneseq
        %v916 = vshrl.u32 %v915, 7
        %v917 = vsub.s32 %v914, %v916
        %v918 = vrot.slane %v904, %v917
        %v919 = vcombine.high %v911, 0
        %v920 = vcombine.high %v918, 0
        %v923 = vpack.i.b16 %v911, %v877
        %v925 = vshrl.u32 %v877, 16
        %v926 = vshrl.u32 %v911, 16
        %v927 = vpack.i.b16 %v926, %v925
        %v931 = vpack.i.b16 %v919, %v885
        %v933 = vshrl.u32 %v885, 16
        %v934 = vshrl.u32 %v919, 16
        %v935 = vpack.i.b16 %v934, %v933
        %v939 = vpack.i.b16 %v918, %v884
        %v941 = vshrl.u32 %v884, 16
        %v942 = vshrl.u32 %v918, 16
        %v943 = vpack.i.b16 %v942, %v941
        %v947 = vpack.i.b16 %v920, %v886
        %v949 = vshrl.u32 %v886, 16
        %v950 = vshrl.u32 %v920, 16
        %v951 = vpack.i.b16 %v950, %v949
        %v953 = vcombine.low %v923, %v939
        %v955 = vunpack.c.l.s4 1983009808
        %v956 = vunpack.c.0.s8 %v955
        %v957 = vlaneseq
        %v958 = vshrl.u32 %v957, 7
        %v959 = vsub.s32 %v956, %v958
        %v960 = vrot.slane %v953, %v959
        %v961 = vcombine.low %v931, %v947
        %v963 = vunpack.c.l.s4 1983009808
        %v964 = vunpack.c.0.s8 %v963
        %v965 = vlaneseq
        %v966 = vshrl.u32 %v965, 7
        %v967 = vsub.s32 %v964, %v966
        %v968 = vrot.slane %v961, %v967
        %v969 = vcombine.low %v960, %v968
        %v971 = vunpack.c.l.s4 1934713408
        %v972 = vunpack.c.0.s8 %v971
        %v973 = vlaneseq
        %v974 = vshrl.u32 %v973, 7
        %v975 = vsub.s32 %v972, %v974
        %v976 = vrot.slane %v969, %v975
        %v977 = vcombine.high %v976, 0
        %v978 = vcombine.low %v927, %v943
        %v980 = vunpack.c.l.s4 1983009808
        %v981 = vunpack.c.0.s8 %v980
        %v982 = vlaneseq
        %v983 = vshrl.u32 %v982, 7
        %v984 = vsub.s32 %v981, %v983
        %v985 = vrot.slane %v978, %v984
        %v986 = vcombine.low %v935, %v951
        %v988 = vunpack.c.l.s4 1983009808
        %v989 = vunpack.c.0.s8 %v988
        %v990 = vlaneseq
        %v991 = vshrl.u32 %v990, 7
        %v992 = vsub.s32 %v989, %v991
        %v993 = vrot.slane %v986, %v992
        %v994 = vcombine.low %v985, %v993
        %v996 = vunpack.c.l.s4 1934713408
        %v997 = vunpack.c.0.s8 %v996
        %v998 = vlaneseq
        %v999 = vshrl.u32 %v998, 7
        %v1000 = vsub.s32 %v997, %v999
        %v1001 = vrot.slane %v994, %v1000
        %v1002 = vcombine.high %v1001, 0
        %v1005 = vpack.i.b16 %v1001, %v976
        %v1006 = vshrl.u32 %v976, 16
        %v1007 = vshrl.u32 %v1001, 16
        %v1008 = vpack.i.b16 %v1007, %v1006
        %v1011 = vpack.i.b16 %v1002, %v977
        %v1012 = vshrl.u32 %v977, 16
        %v1013 = vshrl.u32 %v1002, 16
        %v1014 = vpack.i.b16 %v1013, %v1012
        %vm1015 = vcmask 64512
        %v1017 = vsel %vm1015, %v665, 0
        %v1020 = vsel %vm1015, %v835, 0
        %1022 = vmatprep.subr.bf16.mxu0 0
        %1023 = vmatpush1.bf16.xpose.msra.mxu0 %v1020
        %1024 = vmatprep.subr.bf16.mxu0 0
        %1025 = vmatpush1.bf16.xpose.msra.mxu0 0
        %1026 = vmatprep.subr.bf16.mxu0 0
        %1027 = vmatpush1.bf16.xpose.msra.mxu0 0
        %1028 = vmatprep.subr.bf16.mxu0 0
        %1029 = vmatpush1.bf16.xpose.msra.mxu0 0
        %1030 = vmatprep.subr.bf16.mxu0 0
        %1031 = vmatpush1.bf16.xpose.msra.mxu0 0
        %1032 = vmatprep.subr.bf16.mxu0 0
        %1033 = vmatpush1.bf16.xpose.msra.mxu0 0
        %1034 = vmatprep.subr.bf16.mxu0 0
        %1035 = vmatpush1.bf16.xpose.msra.mxu0 0
        %1036 = vmatprep.subr.bf16.mxu0 0
        %1037 = vmatpush1.bf16.xpose.msra.mxu0 0
        %1038 = vmatprep.subr.bf16.mxu0 0
        %1039 = vmatpush1.bf16.xpose.msra.mxu0 0
        %1040 = vmatprep.subr.bf16.mxu0 0
        %1041 = vmatpush1.bf16.xpose.msra.mxu0 0
        %1042 = vmatprep.subr.bf16.mxu0 0
        %1043 = vmatpush1.bf16.xpose.msra.mxu0 0
        %1044 = vmatprep.subr.bf16.mxu0 0
        %1045 = vmatpush1.bf16.xpose.msra.mxu0 0
        %1046 = vmatprep.subr.bf16.mxu0 0
        %1047 = vmatpush1.bf16.xpose.msra.mxu0 0
        %1048 = vmatprep.subr.bf16.mxu0 0
        %1049 = vmatpush1.bf16.xpose.msra.mxu0 0
        %1050 = vmatprep.subr.bf16.mxu0 0
        %1051 = vmatpush1.bf16.xpose.msra.mxu0 0
        %1052 = vmatprep.subr.bf16.mxu0 0
        %1053 = vmatpush1.bf16.xpose.msra.mxu0 0
        %1054 = vmatprep.mubr.bf16.mxu0 0
        %1055 = vmatmul.mubr.bf16.gmra.mrb[0].mxu0 %v1017
        %v1056 = vpop.f32.mrb[0].mxu0
        %v1057 = vadd.f32 0.0, %v1056
        %v1058 = vpop.f32.mrb[0].mxu0
        %v1059 = vpop.f32.mrb[0].mxu0
        %v1060 = vpop.f32.mrb[0].mxu0
        %1061 = vdwg.mxu0
        %v1063 = vsel %vm1015, %v668, 0
        %v1066 = vsel %vm1015, %v838, 0
        %1068 = vmatprep.subr.bf16.mxu0 0
        %1069 = vmatpush1.bf16.xpose.msra.mxu0 %v1066
        %1070 = vmatprep.subr.bf16.mxu0 0
        %1071 = vmatpush1.bf16.xpose.msra.mxu0 0
        %1072 = vmatprep.subr.bf16.mxu0 0
        %1073 = vmatpush1.bf16.xpose.msra.mxu0 0
        %1074 = vmatprep.subr.bf16.mxu0 0
        %1075 = vmatpush1.bf16.xpose.msra.mxu0 0
        %1076 = vmatprep.subr.bf16.mxu0 0
        %1077 = vmatpush1.bf16.xpose.msra.mxu0 0
        %1078 = vmatprep.subr.bf16.mxu0 0
        %1079 = vmatpush1.bf16.xpose.msra.mxu0 0
        %1080 = vmatprep.subr.bf16.mxu0 0
        %1081 = vmatpush1.bf16.xpose.msra.mxu0 0
        %1082 = vmatprep.subr.bf16.mxu0 0
        %1083 = vmatpush1.bf16.xpose.msra.mxu0 0
        %1084 = vmatprep.subr.bf16.mxu0 0
        %1085 = vmatpush1.bf16.xpose.msra.mxu0 0
        %1086 = vmatprep.subr.bf16.mxu0 0
        %1087 = vmatpush1.bf16.xpose.msra.mxu0 0
        %1088 = vmatprep.subr.bf16.mxu0 0
        %1089 = vmatpush1.bf16.xpose.msra.mxu0 0
        %1090 = vmatprep.subr.bf16.mxu0 0
        %1091 = vmatpush1.bf16.xpose.msra.mxu0 0
        %1092 = vmatprep.subr.bf16.mxu0 0
        %1093 = vmatpush1.bf16.xpose.msra.mxu0 0
        %1094 = vmatprep.subr.bf16.mxu0 0
        %1095 = vmatpush1.bf16.xpose.msra.mxu0 0
        %1096 = vmatprep.subr.bf16.mxu0 0
        %1097 = vmatpush1.bf16.xpose.msra.mxu0 0
        %1098 = vmatprep.subr.bf16.mxu0 0
        %1099 = vmatpush1.bf16.xpose.msra.mxu0 0
        %1100 = vmatprep.mubr.bf16.mxu0 0
        %1101 = vmatmul.mubr.bf16.gmra.mrb[0].mxu0 %v1063
        %v1102 = vpop.f32.mrb[0].mxu0
        %v1103 = vadd.f32 0.0, %v1102
        %v1104 = vpop.f32.mrb[0].mxu0
        %v1105 = vpop.f32.mrb[0].mxu0
        %v1106 = vpop.f32.mrb[0].mxu0
        %1107 = vdwg.mxu0
        %v1109 = vsel %vm1015, %v671, 0
        %v1112 = vsel %vm1015, %v841, 0
        %1114 = vmatprep.subr.bf16.mxu0 0
        %1115 = vmatpush1.bf16.xpose.msra.mxu0 %v1112
        %1116 = vmatprep.subr.bf16.mxu0 0
        %1117 = vmatpush1.bf16.xpose.msra.mxu0 0
        %1118 = vmatprep.subr.bf16.mxu0 0
        %1119 = vmatpush1.bf16.xpose.msra.mxu0 0
        %1120 = vmatprep.subr.bf16.mxu0 0
        %1121 = vmatpush1.bf16.xpose.msra.mxu0 0
        %1122 = vmatprep.subr.bf16.mxu0 0
        %1123 = vmatpush1.bf16.xpose.msra.mxu0 0
        %1124 = vmatprep.subr.bf16.mxu0 0
        %1125 = vmatpush1.bf16.xpose.msra.mxu0 0
        %1126 = vmatprep.subr.bf16.mxu0 0
        %1127 = vmatpush1.bf16.xpose.msra.mxu0 0
        %1128 = vmatprep.subr.bf16.mxu0 0
        %1129 = vmatpush1.bf16.xpose.msra.mxu0 0
        %1130 = vmatprep.subr.bf16.mxu0 0
        %1131 = vmatpush1.bf16.xpose.msra.mxu0 0
        %1132 = vmatprep.subr.bf16.mxu0 0
        %1133 = vmatpush1.bf16.xpose.msra.mxu0 0
        %1134 = vmatprep.subr.bf16.mxu0 0
        %1135 = vmatpush1.bf16.xpose.msra.mxu0 0
        %1136 = vmatprep.subr.bf16.mxu0 0
        %1137 = vmatpush1.bf16.xpose.msra.mxu0 0
        %1138 = vmatprep.subr.bf16.mxu0 0
        %1139 = vmatpush1.bf16.xpose.msra.mxu0 0
        %1140 = vmatprep.subr.bf16.mxu0 0
        %1141 = vmatpush1.bf16.xpose.msra.mxu0 0
        %1142 = vmatprep.subr.bf16.mxu0 0
        %1143 = vmatpush1.bf16.xpose.msra.mxu0 0
        %1144 = vmatprep.subr.bf16.mxu0 0
        %1145 = vmatpush1.bf16.xpose.msra.mxu0 0
        %1146 = vmatprep.mubr.bf16.mxu0 0
        %1147 = vmatmul.mubr.bf16.gmra.mrb[0].mxu0 %v1109
        %v1148 = vpop.f32.mrb[0].mxu0
        %v1149 = vadd.f32 0.0, %v1148
        %v1150 = vpop.f32.mrb[0].mxu0
        %v1151 = vpop.f32.mrb[0].mxu0
        %v1152 = vpop.f32.mrb[0].mxu0
        %1153 = vdwg.mxu0
        %v1155 = vsel %vm1015, %v674, 0
        %v1158 = vsel %vm1015, %v844, 0
        %1160 = vmatprep.subr.bf16.mxu0 0
        %1161 = vmatpush1.bf16.xpose.msra.mxu0 %v1158
        %1162 = vmatprep.subr.bf16.mxu0 0
        %1163 = vmatpush1.bf16.xpose.msra.mxu0 0
        %1164 = vmatprep.subr.bf16.mxu0 0
        %1165 = vmatpush1.bf16.xpose.msra.mxu0 0
        %1166 = vmatprep.subr.bf16.mxu0 0
        %1167 = vmatpush1.bf16.xpose.msra.mxu0 0
        %1168 = vmatprep.subr.bf16.mxu0 0
        %1169 = vmatpush1.bf16.xpose.msra.mxu0 0
        %1170 = vmatprep.subr.bf16.mxu0 0
        %1171 = vmatpush1.bf16.xpose.msra.mxu0 0
        %1172 = vmatprep.subr.bf16.mxu0 0
        %1173 = vmatpush1.bf16.xpose.msra.mxu0 0
        %1174 = vmatprep.subr.bf16.mxu0 0
        %1175 = vmatpush1.bf16.xpose.msra.mxu0 0
        %1176 = vmatprep.subr.bf16.mxu0 0
        %1177 = vmatpush1.bf16.xpose.msra.mxu0 0
        %1178 = vmatprep.subr.bf16.mxu0 0
        %1179 = vmatpush1.bf16.xpose.msra.mxu0 0
        %1180 = vmatprep.subr.bf16.mxu0 0
        %1181 = vmatpush1.bf16.xpose.msra.mxu0 0
        %1182 = vmatprep.subr.bf16.mxu0 0
        %1183 = vmatpush1.bf16.xpose.msra.mxu0 0
        %1184 = vmatprep.subr.bf16.mxu0 0
        %1185 = vmatpush1.bf16.xpose.msra.mxu0 0
        %1186 = vmatprep.subr.bf16.mxu0 0
        %1187 = vmatpush1.bf16.xpose.msra.mxu0 0
        %1188 = vmatprep.subr.bf16.mxu0 0
        %1189 = vmatpush1.bf16.xpose.msra.mxu0 0
        %1190 = vmatprep.subr.bf16.mxu0 0
        %1191 = vmatpush1.bf16.xpose.msra.mxu0 0
        %1192 = vmatprep.mubr.bf16.mxu0 0
        %1193 = vmatmul.mubr.bf16.gmra.mrb[0].mxu0 %v1155
        %v1194 = vpop.f32.mrb[0].mxu0
        %v1195 = vadd.f32 0.0, %v1194
        %v1196 = vpop.f32.mrb[0].mxu0
        %v1197 = vpop.f32.mrb[0].mxu0
        %v1198 = vpop.f32.mrb[0].mxu0
        %1199 = vdwg.mxu0
        %v1200 = vsel %vm1015, %v1057, -inf
        %1201 = vmax.xlane.f32.xlu0 %v1200
        %v1202 = vpop.xlane.xlu0 %1201
        %v1203 = vsel %vm1015, %v1103, -inf
        %1204 = vmax.xlane.f32.xlu0 %v1203
        %v1205 = vpop.xlane.xlu0 %1204
        %v1206 = vsel %vm1015, %v1149, -inf
        %1207 = vmax.xlane.f32.xlu0 %v1206
        %v1208 = vpop.xlane.xlu0 %1207
        %v1209 = vsel %vm1015, %v1195, -inf
        %1210 = vmax.xlane.f32.xlu0 %v1209
        %v1211 = vpop.xlane.xlu0 %1210
        %v1212 = vsub.f32 %v1057, %v1202
        %v1213 = vsub.f32 %v1103, %v1205
        %v1214 = vsub.f32 %v1149, %v1208
        %v1215 = vsub.f32 %v1195, %v1211
        %v1216 = vmul.f32 %v1212, 1.442695
        %v1217 = vpow.pop %v1216
        %v1218 = vmul.f32 %v1213, 1.442695
        %v1219 = vpow.pop %v1218
        %v1220 = vmul.f32 %v1214, 1.442695
        %v1221 = vpow.pop %v1220
        %v1222 = vmul.f32 %v1215, 1.442695
        %v1223 = vpow.pop %v1222
        %v1224 = vsel %vm1015, %v1217, 0.0
        %1225 = vadd.xlane.f32.xlu0 %v1224
        %v1226 = vpop.xlane.xlu0 %1225
        %v1227 = vsel %vm1015, %v1219, 0.0
        %1228 = vadd.xlane.f32.xlu0 %v1227
        %v1229 = vpop.xlane.xlu0 %1228
        %v1230 = vsel %vm1015, %v1221, 0.0
        %1231 = vadd.xlane.f32.xlu0 %v1230
        %v1232 = vpop.xlane.xlu0 %1231
        %v1233 = vsel %vm1015, %v1223, 0.0
        %1234 = vadd.xlane.f32.xlu0 %v1233
        %v1235 = vpop.xlane.xlu0 %1234
        %v1236 = vrcp.pop %v1226
        %v1237 = vrcp.pop %v1229
        %v1238 = vrcp.pop %v1232
        %v1239 = vrcp.pop %v1235
        %v1240 = vmul.f32 %v1217, %v1236
        %v1241 = vmul.f32 %v1219, %v1237
        %v1242 = vmul.f32 %v1221, %v1238
        %v1243 = vmul.f32 %v1223, %v1239
        %v1244 = vpack.c.bf16 %v1240, %v1240
        %v1245 = vpack.c.bf16 %v1241, %v1241
        %v1246 = vpack.c.bf16 %v1242, %v1242
        %v1247 = vpack.c.bf16 %v1243, %v1243
        %v1249 = vsel %vm1015, %v1244, 0
        %vm1251 = vcmask 1043456
        %v1253 = vsel %vm1251, %v1005, 0
        %1255 = vmatprep.subr.bf16.mxu0 0
        %1256 = vmatpush1.bf16.msra.mxu0 %v1253
        %1257 = vmatprep.subr.bf16.mxu0 0
        %1258 = vmatpush1.bf16.msra.mxu0 0
        %1259 = vmatprep.subr.bf16.mxu0 0
        %1260 = vmatpush1.bf16.msra.mxu0 0
        %1261 = vmatprep.subr.bf16.mxu0 0
        %1262 = vmatpush1.bf16.msra.mxu0 0
        %1263 = vmatprep.subr.bf16.mxu0 0
        %1264 = vmatpush1.bf16.msra.mxu0 0
        %1265 = vmatprep.subr.bf16.mxu0 0
        %1266 = vmatpush1.bf16.msra.mxu0 0
        %1267 = vmatprep.subr.bf16.mxu0 0
        %1268 = vmatpush1.bf16.msra.mxu0 0
        %1269 = vmatprep.subr.bf16.mxu0 0
        %1270 = vmatpush1.bf16.msra.mxu0 0
        %1271 = vmatprep.subr.bf16.mxu0 0
        %1272 = vmatpush1.bf16.msra.mxu0 0
        %1273 = vmatprep.subr.bf16.mxu0 0
        %1274 = vmatpush1.bf16.msra.mxu0 0
        %1275 = vmatprep.subr.bf16.mxu0 0
        %1276 = vmatpush1.bf16.msra.mxu0 0
        %1277 = vmatprep.subr.bf16.mxu0 0
        %1278 = vmatpush1.bf16.msra.mxu0 0
        %1279 = vmatprep.subr.bf16.mxu0 0
        %1280 = vmatpush1.bf16.msra.mxu0 0
        %1281 = vmatprep.subr.bf16.mxu0 0
        %1282 = vmatpush1.bf16.msra.mxu0 0
        %1283 = vmatprep.subr.bf16.mxu0 0
        %1284 = vmatpush1.bf16.msra.mxu0 0
        %1285 = vmatprep.subr.bf16.mxu0 0
        %1286 = vmatpush1.bf16.msra.mxu0 0
        %1287 = vmatprep.mubr.bf16.mxu0 0
        %1288 = vmatmul.mubr.bf16.gmra.mrb[0].mxu0 %v1249
        %v1289 = vpop.f32.mrb[0].mxu0
        %v1290 = vadd.f32 0.0, %v1289
        %v1291 = vpop.f32.mrb[0].mxu0
        %v1292 = vpop.f32.mrb[0].mxu0
        %v1293 = vpop.f32.mrb[0].mxu0
        %1294 = vdwg.mxu0
        %v1296 = vsel %vm1015, %v1245, 0
        %v1299 = vsel %vm1251, %v1008, 0
        %1301 = vmatprep.subr.bf16.mxu0 0
        %1302 = vmatpush1.bf16.msra.mxu0 %v1299
        %1303 = vmatprep.subr.bf16.mxu0 0
        %1304 = vmatpush1.bf16.msra.mxu0 0
        %1305 = vmatprep.subr.bf16.mxu0 0
        %1306 = vmatpush1.bf16.msra.mxu0 0
        %1307 = vmatprep.subr.bf16.mxu0 0
        %1308 = vmatpush1.bf16.msra.mxu0 0
        %1309 = vmatprep.subr.bf16.mxu0 0
        %1310 = vmatpush1.bf16.msra.mxu0 0
        %1311 = vmatprep.subr.bf16.mxu0 0
        %1312 = vmatpush1.bf16.msra.mxu0 0
        %1313 = vmatprep.subr.bf16.mxu0 0
        %1314 = vmatpush1.bf16.msra.mxu0 0
        %1315 = vmatprep.subr.bf16.mxu0 0
        %1316 = vmatpush1.bf16.msra.mxu0 0
        %1317 = vmatprep.subr.bf16.mxu0 0
        %1318 = vmatpush1.bf16.msra.mxu0 0
        %1319 = vmatprep.subr.bf16.mxu0 0
        %1320 = vmatpush1.bf16.msra.mxu0 0
        %1321 = vmatprep.subr.bf16.mxu0 0
        %1322 = vmatpush1.bf16.msra.mxu0 0
        %1323 = vmatprep.subr.bf16.mxu0 0
        %1324 = vmatpush1.bf16.msra.mxu0 0
        %1325 = vmatprep.subr.bf16.mxu0 0
        %1326 = vmatpush1.bf16.msra.mxu0 0
        %1327 = vmatprep.subr.bf16.mxu0 0
        %1328 = vmatpush1.bf16.msra.mxu0 0
        %1329 = vmatprep.subr.bf16.mxu0 0
        %1330 = vmatpush1.bf16.msra.mxu0 0
        %1331 = vmatprep.subr.bf16.mxu0 0
        %1332 = vmatpush1.bf16.msra.mxu0 0
        %1333 = vmatprep.mubr.bf16.mxu0 0
        %1334 = vmatmul.mubr.bf16.gmra.mrb[0].mxu0 %v1296
        %v1335 = vpop.f32.mrb[0].mxu0
        %v1336 = vadd.f32 0.0, %v1335
        %v1337 = vpop.f32.mrb[0].mxu0
        %v1338 = vpop.f32.mrb[0].mxu0
        %v1339 = vpop.f32.mrb[0].mxu0
        %1340 = vdwg.mxu0
        %v1342 = vsel %vm1015, %v1246, 0
        %v1345 = vsel %vm1251, %v1011, 0
        %1347 = vmatprep.subr.bf16.mxu0 0
        %1348 = vmatpush1.bf16.msra.mxu0 %v1345
        %1349 = vmatprep.subr.bf16.mxu0 0
        %1350 = vmatpush1.bf16.msra.mxu0 0
        %1351 = vmatprep.subr.bf16.mxu0 0
        %1352 = vmatpush1.bf16.msra.mxu0 0
        %1353 = vmatprep.subr.bf16.mxu0 0
        %1354 = vmatpush1.bf16.msra.mxu0 0
        %1355 = vmatprep.subr.bf16.mxu0 0
        %1356 = vmatpush1.bf16.msra.mxu0 0
        %1357 = vmatprep.subr.bf16.mxu0 0
        %1358 = vmatpush1.bf16.msra.mxu0 0
        %1359 = vmatprep.subr.bf16.mxu0 0
        %1360 = vmatpush1.bf16.msra.mxu0 0
        %1361 = vmatprep.subr.bf16.mxu0 0
        %1362 = vmatpush1.bf16.msra.mxu0 0
        %1363 = vmatprep.subr.bf16.mxu0 0
        %1364 = vmatpush1.bf16.msra.mxu0 0
        %1365 = vmatprep.subr.bf16.mxu0 0
        %1366 = vmatpush1.bf16.msra.mxu0 0
        %1367 = vmatprep.subr.bf16.mxu0 0
        %1368 = vmatpush1.bf16.msra.mxu0 0
        %1369 = vmatprep.subr.bf16.mxu0 0
        %1370 = vmatpush1.bf16.msra.mxu0 0
        %1371 = vmatprep.subr.bf16.mxu0 0
        %1372 = vmatpush1.bf16.msra.mxu0 0
        %1373 = vmatprep.subr.bf16.mxu0 0
        %1374 = vmatpush1.bf16.msra.mxu0 0
        %1375 = vmatprep.subr.bf16.mxu0 0
        %1376 = vmatpush1.bf16.msra.mxu0 0
        %1377 = vmatprep.subr.bf16.mxu0 0
        %1378 = vmatpush1.bf16.msra.mxu0 0
        %1379 = vmatprep.mubr.bf16.mxu0 0
        %1380 = vmatmul.mubr.bf16.gmra.mrb[0].mxu0 %v1342
        %v1381 = vpop.f32.mrb[0].mxu0
        %v1382 = vadd.f32 0.0, %v1381
        %v1383 = vpop.f32.mrb[0].mxu0
        %v1384 = vpop.f32.mrb[0].mxu0
        %v1385 = vpop.f32.mrb[0].mxu0
        %1386 = vdwg.mxu0
        %v1388 = vsel %vm1015, %v1247, 0
        %v1391 = vsel %vm1251, %v1014, 0
        %1393 = vmatprep.subr.bf16.mxu0 0
        %1394 = vmatpush1.bf16.msra.mxu0 %v1391
        %1395 = vmatprep.subr.bf16.mxu0 0
        %1396 = vmatpush1.bf16.msra.mxu0 0
        %1397 = vmatprep.subr.bf16.mxu0 0
        %1398 = vmatpush1.bf16.msra.mxu0 0
        %1399 = vmatprep.subr.bf16.mxu0 0
        %1400 = vmatpush1.bf16.msra.mxu0 0
        %1401 = vmatprep.subr.bf16.mxu0 0
        %1402 = vmatpush1.bf16.msra.mxu0 0
        %1403 = vmatprep.subr.bf16.mxu0 0
        %1404 = vmatpush1.bf16.msra.mxu0 0
        %1405 = vmatprep.subr.bf16.mxu0 0
        %1406 = vmatpush1.bf16.msra.mxu0 0
        %1407 = vmatprep.subr.bf16.mxu0 0
        %1408 = vmatpush1.bf16.msra.mxu0 0
        %1409 = vmatprep.subr.bf16.mxu0 0
        %1410 = vmatpush1.bf16.msra.mxu0 0
        %1411 = vmatprep.subr.bf16.mxu0 0
        %1412 = vmatpush1.bf16.msra.mxu0 0
        %1413 = vmatprep.subr.bf16.mxu0 0
        %1414 = vmatpush1.bf16.msra.mxu0 0
        %1415 = vmatprep.subr.bf16.mxu0 0
        %1416 = vmatpush1.bf16.msra.mxu0 0
        %1417 = vmatprep.subr.bf16.mxu0 0
        %1418 = vmatpush1.bf16.msra.mxu0 0
        %1419 = vmatprep.subr.bf16.mxu0 0
        %1420 = vmatpush1.bf16.msra.mxu0 0
        %1421 = vmatprep.subr.bf16.mxu0 0
        %1422 = vmatpush1.bf16.msra.mxu0 0
        %1423 = vmatprep.subr.bf16.mxu0 0
        %1424 = vmatpush1.bf16.msra.mxu0 0
        %1425 = vmatprep.mubr.bf16.mxu0 0
        %1426 = vmatmul.mubr.bf16.gmra.mrb[0].mxu0 %v1388
        %v1427 = vpop.f32.mrb[0].mxu0
        %v1428 = vadd.f32 0.0, %v1427
        %v1429 = vpop.f32.mrb[0].mxu0
        %v1430 = vpop.f32.mrb[0].mxu0
        %v1431 = vpop.f32.mrb[0].mxu0
        %1432 = vdwg.mxu0
        %v1433 = vcombine.low %v1290, %v1382
        %v1434 = vcombine.high %v1290, %v1382
        %v1436 = vunpack.c.l.s4 1983009808
        %v1437 = vunpack.c.0.s8 %v1436
        %v1438 = vlaneseq
        %v1439 = vshrl.u32 %v1438, 7
        %v1440 = vsub.s32 %v1437, %v1439
        %v1441 = vrot.slane %v1433, %v1440
        %v1443 = vunpack.c.l.s4 1983009808
        %v1444 = vunpack.c.0.s8 %v1443
        %v1445 = vlaneseq
        %v1446 = vshrl.u32 %v1445, 7
        %v1447 = vsub.s32 %v1444, %v1446
        %v1448 = vrot.slane %v1434, %v1447
        %v1449 = vcombine.low %v1336, %v1428
        %v1450 = vcombine.high %v1336, %v1428
        %v1452 = vunpack.c.l.s4 1983009808
        %v1453 = vunpack.c.0.s8 %v1452
        %v1454 = vlaneseq
        %v1455 = vshrl.u32 %v1454, 7
        %v1456 = vsub.s32 %v1453, %v1455
        %v1457 = vrot.slane %v1449, %v1456
        %v1459 = vunpack.c.l.s4 1983009808
        %v1460 = vunpack.c.0.s8 %v1459
        %v1461 = vlaneseq
        %v1462 = vshrl.u32 %v1461, 7
        %v1463 = vsub.s32 %v1460, %v1462
        %v1464 = vrot.slane %v1450, %v1463
        %v1465 = vcombine.low %v1441, %v1457
        %v1466 = vcombine.high %v1441, %v1457
        %v1468 = vunpack.c.l.s4 1934713408
        %v1469 = vunpack.c.0.s8 %v1468
        %v1470 = vlaneseq
        %v1471 = vshrl.u32 %v1470, 7
        %v1472 = vsub.s32 %v1469, %v1471
        %v1473 = vrot.slane %v1465, %v1472
        %v1475 = vunpack.c.l.s4 1934713408
        %v1476 = vunpack.c.0.s8 %v1475
        %v1477 = vlaneseq
        %v1478 = vshrl.u32 %v1477, 7
        %v1479 = vsub.s32 %v1476, %v1478
        %v1480 = vrot.slane %v1466, %v1479
        %v1481 = vcombine.low %v1448, %v1464
        %v1482 = vcombine.high %v1448, %v1464
        %v1484 = vunpack.c.l.s4 1934713408
        %v1485 = vunpack.c.0.s8 %v1484
        %v1486 = vlaneseq
        %v1487 = vshrl.u32 %v1486, 7
        %v1488 = vsub.s32 %v1485, %v1487
        %v1489 = vrot.slane %v1481, %v1488
        %v1491 = vunpack.c.l.s4 1934713408
        %v1492 = vunpack.c.0.s8 %v1491
        %v1493 = vlaneseq
        %v1494 = vshrl.u32 %v1493, 7
        %v1495 = vsub.s32 %v1492, %v1494
        %v1496 = vrot.slane %v1482, %v1495
        %v1497 = vcombine.high %v1473, 0.0
        %v1498 = vcombine.high %v1480, 0.0
        %v1499 = vcombine.high %v1489, 0.0
        %v1500 = vcombine.high %v1496, 0.0
        %v1501 = vcombine.low %v1473, %v1480
        %v1503 = vunpack.c.l.s4 1983009808
        %v1504 = vunpack.c.0.s8 %v1503
        %v1505 = vlaneseq
        %v1506 = vshrl.u32 %v1505, 7
        %v1507 = vsub.s32 %v1504, %v1506
        %v1508 = vrot.slane %v1501, %v1507
        %v1509 = vcombine.low %v1497, %v1498
        %v1511 = vunpack.c.l.s4 1983009808
        %v1512 = vunpack.c.0.s8 %v1511
        %v1513 = vlaneseq
        %v1514 = vshrl.u32 %v1513, 7
        %v1515 = vsub.s32 %v1512, %v1514
        %v1516 = vrot.slane %v1509, %v1515
        %v1517 = vcombine.low %v1489, %v1496
        %v1519 = vunpack.c.l.s4 1983009808
        %v1520 = vunpack.c.0.s8 %v1519
        %v1521 = vlaneseq
        %v1522 = vshrl.u32 %v1521, 7
        %v1523 = vsub.s32 %v1520, %v1522
        %v1524 = vrot.slane %v1517, %v1523
        %v1525 = vcombine.low %v1499, %v1500
        %v1527 = vunpack.c.l.s4 1983009808
        %v1528 = vunpack.c.0.s8 %v1527
        %v1529 = vlaneseq
        %v1530 = vshrl.u32 %v1529, 7
        %v1531 = vsub.s32 %v1528, %v1530
        %v1532 = vrot.slane %v1525, %v1531
        %v1533 = vcombine.low %v1508, %v1516
        %v1534 = vcombine.high %v1508, %v1516
        %v1536 = vunpack.c.l.s4 1934713408
        %v1537 = vunpack.c.0.s8 %v1536
        %v1538 = vlaneseq
        %v1539 = vshrl.u32 %v1538, 7
        %v1540 = vsub.s32 %v1537, %v1539
        %v1541 = vrot.slane %v1533, %v1540
        %v1543 = vunpack.c.l.s4 1934713408
        %v1544 = vunpack.c.0.s8 %v1543
        %v1545 = vlaneseq
        %v1546 = vshrl.u32 %v1545, 7
        %v1547 = vsub.s32 %v1544, %v1546
        %v1548 = vrot.slane %v1534, %v1547
        %v1549 = vcombine.low %v1524, %v1532
        %v1550 = vcombine.high %v1524, %v1532
        %v1552 = vunpack.c.l.s4 1934713408
        %v1553 = vunpack.c.0.s8 %v1552
        %v1554 = vlaneseq
        %v1555 = vshrl.u32 %v1554, 7
        %v1556 = vsub.s32 %v1553, %v1555
        %v1557 = vrot.slane %v1549, %v1556
        %v1559 = vunpack.c.l.s4 1934713408
        %v1560 = vunpack.c.0.s8 %v1559
        %v1561 = vlaneseq
        %v1562 = vshrl.u32 %v1561, 7
        %v1563 = vsub.s32 %v1560, %v1562
        %v1564 = vrot.slane %v1550, %v1563
        %v1565 = vcombine.low %v1541, %v1557
        %v1566 = vcombine.high %v1541, %v1557
        %v1567 = vcombine.low %v1548, %v1564
        %v1568 = vcombine.high %v1548, %v1564
        %1570 = vrot.lane.b32.xlu0 %v1566, 8
        %v1571 = vpop.permute.xlu0 %1570
        %1574 = vrot.lane.b32.xlu0 %v1567, 16
        %v1575 = vpop.permute.xlu0 %1574
        %1578 = vrot.lane.b32.xlu0 %v1568, 24
        %v1579 = vpop.permute.xlu0 %1578
        %v1581 = vsel %vm1015, %v1565, %v1571
        %vm1582 = vcmask 130048
        %v1583 = vsel %vm1582, %v1581, %v1575
        %vm1584 = vcmask 195584
        %v1585 = vsel %vm1584, %v1583, %v1579
        %v1586 = vpack.c.bf16 %v1585, %v1585
        %v1587 = vld [vmem:[%s4] sm:$0xf]
        %v1588 = vld [vmem:[%s4 + $0x4] sm:$0xf]
        %v1589 = vld [vmem:[%s4 + $0x8] sm:$0xf]
        %v1590 = vld [vmem:[%s4 + $0xc] sm:$0xf]
        %v1595 = vunpack.c.l.b16 %v1587
        %v1596 = vunpack.c.l.b16 %v1588
        %v1597 = vunpack.c.l.b16 %v1589
        %v1598 = vunpack.c.l.b16 %v1590
        %v1599 = vpack.c.b16 %v1596, %v1595
        %v1600 = vpack.c.b16 %v1598, %v1597
        %v1604 = vsel %vm417, %v1586, 0
        %1606 = vmatprep.subr.bf16.mxu0 0
        %1607 = vmatpush1.bf16.msra.mxu0 %v1599
        %1608 = vmatprep.subr.bf16.mxu0 0
        %1609 = vmatpush1.bf16.msra.mxu0 %v1600
        %1610 = vmatprep.subr.bf16.mxu0 0
        %1611 = vmatpush1.bf16.msra.mxu0 0
        %1612 = vmatprep.subr.bf16.mxu0 0
        %1613 = vmatpush1.bf16.msra.mxu0 0
        %1614 = vmatprep.subr.bf16.mxu0 0
        %1615 = vmatpush1.bf16.msra.mxu0 0
        %1616 = vmatprep.subr.bf16.mxu0 0
        %1617 = vmatpush1.bf16.msra.mxu0 0
        %1618 = vmatprep.subr.bf16.mxu0 0
        %1619 = vmatpush1.bf16.msra.mxu0 0
        %1620 = vmatprep.subr.bf16.mxu0 0
        %1621 = vmatpush1.bf16.msra.mxu0 0
        %1622 = vmatprep.subr.bf16.mxu0 0
        %1623 = vmatpush1.bf16.msra.mxu0 0
        %1624 = vmatprep.subr.bf16.mxu0 0
        %1625 = vmatpush1.bf16.msra.mxu0 0
        %1626 = vmatprep.subr.bf16.mxu0 0
        %1627 = vmatpush1.bf16.msra.mxu0 0
        %1628 = vmatprep.subr.bf16.mxu0 0
        %1629 = vmatpush1.bf16.msra.mxu0 0
        %1630 = vmatprep.subr.bf16.mxu0 0
        %1631 = vmatpush1.bf16.msra.mxu0 0
        %1632 = vmatprep.subr.bf16.mxu0 0
        %1633 = vmatpush1.bf16.msra.mxu0 0
        %1634 = vmatprep.subr.bf16.mxu0 0
        %1635 = vmatpush1.bf16.msra.mxu0 0
        %1636 = vmatprep.subr.bf16.mxu0 0
        %1637 = vmatpush1.bf16.msra.mxu0 0
        %1638 = vmatprep.mubr.bf16.mxu0 0
        %1639 = vmatmul.mubr.bf16.gmra.mrb[0].mxu0 %v1604
        %v1640 = vpop.f32.mrb[0].mxu0
        %v1641 = vadd.f32 0.0, %v1640
        %v1642 = vpop.f32.mrb[0].mxu0
        %v1643 = vpop.f32.mrb[0].mxu0
        %v1644 = vpop.f32.mrb[0].mxu0
        %1645 = vdwg.mxu0
        %v1646 = vadd.f32 %v414, %v1641
        %v1647 = vld [vmem:[%s5] sm:$0x1]
        %v1649 = vlaneseq
        %v1650 = vshrl.u32 %v1649, 7
        %v1651 = vsub.s32 0, %v1650
        %v1652 = vrot.slane %v1647, %v1651
        %v1654 = vadd.f32 %v1646, %v1652
        %v1655 = vld [vmem:[%s6] sm:$0x1]
        %v1656 = vld [vmem:[%s7] sm:$0x1]
        %v1657 = vsel %vm417, %v1654, 0.0
        %1658 = vadd.xlane.f32.xlu0 %v1657
        %v1659 = vpop.xlane.xlu0 %1658
        %v1660 = vmul.f32 %v1659, %v421
        %v1661 = vsub.f32 %v1654, %v1660
        %v1662 = vmul.f32 %v1661, %v1661
        %v1663 = vsel %vm417, %v1662, 0.0
        %1664 = vadd.xlane.f32.xlu0 %v1663
        %v1665 = vpop.xlane.xlu0 %1664
        %v1666 = vmul.f32 %v1665, %v421
        %v1667 = vadd.f32 %v1666, 1e-05
        %v1668 = vrsqrt.pop %v1667
        %v1669 = vmul.f32 %v1661, %v1668
        %v1671 = vlaneseq
        %v1672 = vshrl.u32 %v1671, 7
        %v1673 = vsub.s32 0, %v1672
        %v1674 = vrot.slane %v1655, %v1673
        %v1676 = vmul.f32 %v1669, %v1674
        %v1678 = vlaneseq
        %v1679 = vshrl.u32 %v1678, 7
        %v1680 = vsub.s32 0, %v1679
        %v1681 = vrot.slane %v1656, %v1680
        %v1683 = vadd.f32 %v1676, %v1681
        %v1684 = vpack.c.bf16 %v1683, %v1683
        %v1685 = vld [vmem:[%s8] sm:$0xf]
        %v1686 = vld [vmem:[%s8 + $0x4] sm:$0xf]
        %v1687 = vld [vmem:[%s8 + $0x8] sm:$0xf]
        %v1688 = vld [vmem:[%s8 + $0xc] sm:$0xf]
        %v1689 = vld [vmem:[%s9] sm:$0x1]
        %v1691 = vlaneseq
        %v1692 = vshrl.u32 %v1691, 7
        %v1693 = vsub.s32 0, %v1692
        %v1694 = vrot.slane %v1689, %v1693
        %v1700 = vunpack.c.l.b16 %v1685
        %v1701 = vunpack.c.l.b16 %v1686
        %v1702 = vunpack.c.l.b16 %v1687
        %v1703 = vunpack.c.l.b16 %v1688
        %v1704 = vpack.c.b16 %v1701, %v1700
        %v1705 = vpack.c.b16 %v1703, %v1702
        %v1709 = vsel %vm417, %v1684, 0
        %1711 = vmatprep.subr.bf16.mxu0 0
        %1712 = vmatpush1.bf16.msra.mxu0 %v1704
        %1713 = vmatprep.subr.bf16.mxu0 0
        %1714 = vmatpush1.bf16.msra.mxu0 %v1705
        %1715 = vmatprep.subr.bf16.mxu0 0
        %1716 = vmatpush1.bf16.msra.mxu0 0
        %1717 = vmatprep.subr.bf16.mxu0 0
        %1718 = vmatpush1.bf16.msra.mxu0 0
        %1719 = vmatprep.subr.bf16.mxu0 0
        %1720 = vmatpush1.bf16.msra.mxu0 0
        %1721 = vmatprep.subr.bf16.mxu0 0
        %1722 = vmatpush1.bf16.msra.mxu0 0
        %1723 = vmatprep.subr.bf16.mxu0 0
        %1724 = vmatpush1.bf16.msra.mxu0 0
        %1725 = vmatprep.subr.bf16.mxu0 0
        %1726 = vmatpush1.bf16.msra.mxu0 0
        %1727 = vmatprep.subr.bf16.mxu0 0
        %1728 = vmatpush1.bf16.msra.mxu0 0
        %1729 = vmatprep.subr.bf16.mxu0 0
        %1730 = vmatpush1.bf16.msra.mxu0 0
        %1731 = vmatprep.subr.bf16.mxu0 0
        %1732 = vmatpush1.bf16.msra.mxu0 0
        %1733 = vmatprep.subr.bf16.mxu0 0
        %1734 = vmatpush1.bf16.msra.mxu0 0
        %1735 = vmatprep.subr.bf16.mxu0 0
        %1736 = vmatpush1.bf16.msra.mxu0 0
        %1737 = vmatprep.subr.bf16.mxu0 0
        %1738 = vmatpush1.bf16.msra.mxu0 0
        %1739 = vmatprep.subr.bf16.mxu0 0
        %1740 = vmatpush1.bf16.msra.mxu0 0
        %1741 = vmatprep.subr.bf16.mxu0 0
        %1742 = vmatpush1.bf16.msra.mxu0 0
        %1743 = vmatprep.mubr.bf16.mxu0 0
        %1744 = vmatmul.mubr.bf16.gmra.mrb[0].mxu0 %v1709
        %v1745 = vpop.f32.mrb[0].mxu0
        %v1746 = vadd.f32 %v1694, %v1745
        %v1747 = vpop.f32.mrb[0].mxu0
        %v1748 = vpop.f32.mrb[0].mxu0
        %v1749 = vpop.f32.mrb[0].mxu0
        %1750 = vdwg.mxu0
        %v1751 = vpack.c.bf16 %v1746, %v1746
        %v1752 = vmul.bf16 %v1751, 1056980736
        %v1753 = vmul.bf16 %v1751, 1027030327
        %v1754 = vmul.bf16 %v1753, %v1751
        %v1755 = vmul.bf16 %v1754, %v1751
        %v1756 = vadd.bf16 %v1751, %v1755
        %v1757 = vmul.bf16 %v1756, 1061961548
        %v1758 = vtanh.bf16.pop %v1757
        %v1759 = vadd.bf16 %v1758, 1065369472
        %v1760 = vmul.bf16 %v1752, %v1759
        %v1761 = vld [vmem:[%s10] sm:$0xf]
        %v1762 = vld [vmem:[%s10 + $0x4] sm:$0xf]
        %v1763 = vld [vmem:[%s10 + $0x8] sm:$0xf]
        %v1764 = vld [vmem:[%s10 + $0xc] sm:$0xf]
        %v1765 = vld [vmem:[%s10 + $0x10] sm:$0xf]
        %v1766 = vld [vmem:[%s10 + $0x14] sm:$0xf]
        %v1767 = vld [vmem:[%s10 + $0x18] sm:$0xf]
        %v1768 = vld [vmem:[%s10 + $0x1c] sm:$0xf]
        %v1769 = vld [vmem:[%s10 + $0x20] sm:$0xf]
        %v1770 = vld [vmem:[%s10 + $0x24] sm:$0xf]
        %v1771 = vld [vmem:[%s10 + $0x28] sm:$0xf]
        %v1772 = vld [vmem:[%s10 + $0x2c] sm:$0xf]
        %v1773 = vld [vmem:[%s10 + $0x30] sm:$0xf]
        %v1774 = vld [vmem:[%s10 + $0x34] sm:$0xf]
        %v1775 = vld [vmem:[%s10 + $0x38] sm:$0xf]
        %v1776 = vld [vmem:[%s10 + $0x3c] sm:$0xf]
        %v1777 = vld [vmem:[%s11] sm:$0x1]
        %v1779 = vlaneseq
        %v1780 = vshrl.u32 %v1779, 7
        %v1781 = vsub.s32 0, %v1780
        %v1782 = vrot.slane %v1777, %v1781
        %v1800 = vunpack.c.l.b16 %v1761
        %v1801 = vunpack.c.l.b16 %v1762
        %v1802 = vunpack.c.l.b16 %v1763
        %v1803 = vunpack.c.l.b16 %v1764
        %v1804 = vunpack.c.l.b16 %v1765
        %v1805 = vunpack.c.l.b16 %v1766
        %v1806 = vunpack.c.l.b16 %v1767
        %v1807 = vunpack.c.l.b16 %v1768
        %v1808 = vunpack.c.l.b16 %v1769
        %v1809 = vunpack.c.l.b16 %v1770
        %v1810 = vunpack.c.l.b16 %v1771
        %v1811 = vunpack.c.l.b16 %v1772
        %v1812 = vunpack.c.l.b16 %v1773
        %v1813 = vunpack.c.l.b16 %v1774
        %v1814 = vunpack.c.l.b16 %v1775
        %v1815 = vunpack.c.l.b16 %v1776
        %v1816 = vpack.c.b16 %v1801, %v1800
        %v1817 = vpack.c.b16 %v1803, %v1802
        %v1818 = vpack.c.b16 %v1805, %v1804
        %v1819 = vpack.c.b16 %v1807, %v1806
        %v1820 = vpack.c.b16 %v1809, %v1808
        %v1821 = vpack.c.b16 %v1811, %v1810
        %v1822 = vpack.c.b16 %v1813, %v1812
        %v1823 = vpack.c.b16 %v1815, %v1814
        %1832 = vmatprep.subr.bf16.mxu0 0
        %1833 = vmatpush1.bf16.msra.mxu0 %v1816
        %1834 = vmatprep.subr.bf16.mxu0 0
        %1835 = vmatpush1.bf16.msra.mxu0 %v1817
        %1836 = vmatprep.subr.bf16.mxu0 0
        %1837 = vmatpush1.bf16.msra.mxu0 %v1818
        %1838 = vmatprep.subr.bf16.mxu0 0
        %1839 = vmatpush1.bf16.msra.mxu0 %v1819
        %1840 = vmatprep.subr.bf16.mxu0 0
        %1841 = vmatpush1.bf16.msra.mxu0 %v1820
        %1842 = vmatprep.subr.bf16.mxu0 0
        %1843 = vmatpush1.bf16.msra.mxu0 %v1821
        %1844 = vmatprep.subr.bf16.mxu0 0
        %1845 = vmatpush1.bf16.msra.mxu0 %v1822
        %1846 = vmatprep.subr.bf16.mxu0 0
        %1847 = vmatpush1.bf16.msra.mxu0 %v1823
        %1848 = vmatprep.subr.bf16.mxu0 0
        %1849 = vmatpush1.bf16.msra.mxu0 0
        %1850 = vmatprep.subr.bf16.mxu0 0
        %1851 = vmatpush1.bf16.msra.mxu0 0
        %1852 = vmatprep.subr.bf16.mxu0 0
        %1853 = vmatpush1.bf16.msra.mxu0 0
        %1854 = vmatprep.subr.bf16.mxu0 0
        %1855 = vmatpush1.bf16.msra.mxu0 0
        %1856 = vmatprep.subr.bf16.mxu0 0
        %1857 = vmatpush1.bf16.msra.mxu0 0
        %1858 = vmatprep.subr.bf16.mxu0 0
        %1859 = vmatpush1.bf16.msra.mxu0 0
        %1860 = vmatprep.subr.bf16.mxu0 0
        %1861 = vmatpush1.bf16.msra.mxu0 0
        %1862 = vmatprep.subr.bf16.mxu0 0
        %1863 = vmatpush1.bf16.msra.mxu0 0
        %1864 = vmatprep.mubr.bf16.mxu0 0
        %1865 = vmatmul.mubr.bf16.gmra.mrb[0].mxu0 %v1760
        %v1866 = vpop.f32.mrb[0].mxu0
        %v1867 = vadd.f32 %v1782, %v1866
        %v1868 = vpop.f32.mrb[0].mxu0
        %v1869 = vpop.f32.mrb[0].mxu0
        %v1870 = vpop.f32.mrb[0].mxu0
        %1871 = vdwg.mxu0
        %v1872 = vadd.f32 %v1654, %v1867
        %1873 = vst.msk [vmem:[%s404] sm:$0xff] %vm417, %v1872
        %s1874 = sand.u32 %s291, 1
        %s1875 = scalar_lea.sflag [#allocation3], %s1874
        %s1876 = sand.u32 %s291, 1
        %s1877 = smul.addr %s1876, 8
        %s1878 = scalar_lea.vmem [#allocation2], %s1877
        // Predicated region
        $region69: #{tpu_custom_call.1} parent=67 // pred_check
          %p1879 = pneg %p301
        $region70: #{tpu_custom_call.1} parent=67 // pred_check_branch
          %1881 = sbr.rel (%p1879) target = $region72
        $region71: #{tpu_custom_call.1} parent=67 // pred_region
          %s1883 = ssub.s32 128, 128
          %1884 = vsyncadd %s1875, %s1883
          %s1885 = smul.addr %s26, 128
          %s1886 = scalar_lea.hbm %s12, %s1885
          %s1888 = sshll.u32 %s1878, 4
          %s1889 = int_to_ptr.vmem [resolvable:$true] %s1888
          %1891 = dma.vmem_to_hbm [thread:$0]  %s1889, 128, %s1886, %s1875
        $region72: #{tpu_custom_call.1} parent=67 // pred_fallthru
          _
      $region68: #{tpu_custom_call.1} parent=5 // pred_fallthru
        _
      %p1892 = scmp.le.s32.totalorder 2, %s21
      // Predicated region
      $region73: #{tpu_custom_call.1} parent=5 // pred_check
        %p1893 = pneg %p1892
      $region74: #{tpu_custom_call.1} parent=5 // pred_check_branch
        %1895 = sbr.rel (%p1893) target = $region76
      $region75: #{tpu_custom_call.1} parent=5 // pred_region
        %s1896 = ssub.s32 %s21, 2
        // Predicated region
        $region77: #{tpu_custom_call.1} parent=75 // pred_check
          %p1897 = pneg %p307
        $region78: #{tpu_custom_call.1} parent=75 // pred_check_branch
          %1899 = sbr.rel (%p1897) target = $region80
        $region79: #{tpu_custom_call.1} parent=75 // pred_region
          %s1900 = sand.u32 %s292, 1
          %s1901 = scalar_lea.sflag [#allocation3], %s1900
          %s1902 = sand.u32 %s292, 1
          %s1903 = smul.addr %s1902, 8
          %s1904 = scalar_lea.vmem [#allocation2], %s1903
          %1905 = dma.done %s1901, 128
        $region80: #{tpu_custom_call.1} parent=75 // pred_fallthru
          _
      $region76: #{tpu_custom_call.1} parent=5 // pred_fallthru
        _
    $region6: #{tpu_custom_call.1} parent=1 // loop_footer
      %s25 = sadd.s32 1, %s21
    $region7: #{tpu_custom_call.1} parent=1 // loop_footer_branch
      %20 = sbr.rel target = $region3
    $region8: #{tpu_custom_call.1} parent=1 // loop_exit
      _
    %1906 = vsyncpa [#allocation3], 1
    %s1907 = scalar_lea.sflag [#allocation3], 1
    %1908 = vsyncpa %s1907, 1

</llo_original>
